<compile_context>
chip_gen: v6e
topology: v6e:2x2x1
jax: 0.10.0
libtpu: 0.0.40
codegen_flags: <defaults>
</compile_context>

<pallas_src>
import math

import jax
import jax.numpy as jnp
import numpy as np
from jax import lax
from jax.experimental import pallas as pl
from jax.experimental.pallas import tpu as pltpu

MIN_VALUE = 0.0
MAX_VALUE = 6.4

CIN = 3
COUT = 32
K = 5
STRIDE = 2
PAD = 1
POOL_K = 3
PADAMT = K - 1 - PAD            # 3
NEG_BIG = -1e30                 # stand-in for -inf max-pool padding
LANE = 128


def _derive_dims(Hi, Wi):
    HO = (Hi - 1) * STRIDE - 2 * PAD + K      # = 2*Hi + 1
    WO = (Wi - 1) * STRIDE - 2 * PAD + K      # = 2*Wi + 1
    NE = Hi + 1                               # number of even output rows (oh = 0,2,...)
    WB = (WO + 2) * COUT                      # halo + valid + halo columns
    WBP = ((WB + LANE - 1) // LANE) * LANE    # lane-aligned per-phase width
    return HO, WO, NE, WB, WBP


def build_params(w_pt, b_pt, Wi):
    """One-time (parameter-load-time) construction of the fused conv weights.

    Returns:
      w_all   : (3*Wi*CIN, 2*WBP) f32.  Columns [0:WBP) produce the even output
                rows, [WBP:2*WBP) the (extended) odd output rows; within a phase
                columns are packed (ow_with_halo major, cout minor); halo / pad
                columns are zero.
      bias_row: (1, 2*WBP) f32.  Per-channel bias in valid columns, NEG_BIG in
                the W-halo columns (acts as -inf max-pool padding), 0 in the
                lane-padding tail.
    """
    _, WO, _, WB, WBP = _derive_dims(Wi, Wi)

    w_np = np.asarray(w_pt, np.float32)            # (CIN, COUT, K, K) ConvTranspose2d layout
    b_np = np.asarray(b_pt, np.float32)            # (COUT,)
    # conv_transpose == conv with spatially flipped weights; reorder to (kh, kw, cin, cout)
    wf = np.transpose(w_np[:, :, ::-1, ::-1], (2, 3, 0, 1))          # (K, K, CIN, COUT)

    # W-direction block-Toeplitz selector S[kw, iw, owb]; owb = ow + 1, halo cols stay 0.
    S = np.zeros((K, Wi, WO + 2), np.float32)
    for kw in range(K):
        for iw in range(Wi):
            ow = STRIDE * iw + PADAMT - kw
            if 0 <= ow < WO:
                S[kw, iw, ow + 1] = 1.0
    w2 = np.einsum("hwco,wip->hicpo", wf, S).reshape(K, Wi * CIN, WB)
    w2 = np.pad(w2, ((0, 0), (0, 0), (0, WBP - WB)))                 # lane-pad columns

    # Row-shift structure: L row i = [xr[i] | xr[i+1] | xr[i+2]]  (xr has 2 zero rows on top)
    #   even row i: xr[i+1]@w2[1] + xr[i+2]@w2[3]
    #   odd  row i: xr[i]@w2[0] + xr[i+1]@w2[2] + xr[i+2]@w2[4]
    zero_blk = np.zeros_like(w2[0])
    w_even = np.concatenate([zero_blk, w2[1], w2[3]], axis=0)        # (3*Wi*CIN, WBP)
    w_odd = np.concatenate([w2[0], w2[2], w2[4]], axis=0)            # (3*Wi*CIN, WBP)
    w_all = np.concatenate([w_even, w_odd], axis=1)                  # (3*Wi*CIN, 2*WBP)

    bias_phase = np.concatenate([
        np.full((COUT,), NEG_BIG, np.float32),                       # left W-halo
        np.tile(b_np, WO),                                           # valid columns
        np.full((COUT,), NEG_BIG, np.float32),                       # right W-halo
        np.zeros((WBP - WB,), np.float32),                           # lane padding
    ])
    bias_row = np.concatenate([bias_phase, bias_phase]).reshape(1, 2 * WBP)

    # TODO(synk): for larger accuracy budgets, cast w_all / LHS to bf16 for the MXU
    # (keep bias / pool sentinel / clamp in f32); kept f32 here to meet 1e-4 rtol.
    return jnp.asarray(w_all), jnp.asarray(bias_row)


def _make_kernel(Hi, Wi, NB, WBP, NE):
    Mrows = Hi + 2                 # LHS rows per image (row i -> even oh=2i / odd oh=2i-1)
    KDIM = 3 * Wi * CIN
    width = 2 * WBP

    def kernel(l_ref, w_ref, b_ref, o_ref):
        f32 = jnp.float32
        # ReLU fused here (L is just a re-arrangement of the raw input rows).
        lhs = jnp.maximum(l_ref[...], 0.0).reshape(NB * Mrows, KDIM)

        # One MXU matmul produces both output-row phases: [even | odd-extended].
        y = jnp.dot(lhs, w_ref[...], preferred_element_type=f32) + b_ref[...]

        # Horizontal 3-max of the pool via XLU lane rotations.  Using both the
        # +COUT and (width - COUT) rotations keeps the result independent of the
        # roll sign convention (the *set* of shifted copies is identical), and
        # valid lanes never see wrap-around thanks to the W-halo columns.
        h = jnp.maximum(y, jnp.maximum(pltpu.roll(y, COUT, 1),
                                       pltpu.roll(y, width - COUT, 1)))
        h = h.reshape(NB, Mrows, width)
        he = h[:, :, :WBP]          # even rows   (rows 0..Hi meaningful)
        ho = h[:, :, WBP:]          # odd rows, extended with oh = -1 and oh = HO

        # The two virtual odd rows act as -inf max-pool padding.
        ridx = lax.broadcasted_iota(jnp.int32, ho.shape, 1)
        ho = jnp.where((ridx >= 1) & (ridx <= Hi), ho, NEG_BIG)

        # Vertical 3-max across the two row phases.
        pe = jnp.maximum(he[:, :NE], jnp.maximum(ho[:, :NE], ho[:, 1:NE + 1]))
        po = jnp.maximum(ho[:, 1:NE + 1],
                         jnp.maximum(he[:, :NE], he[:, 1:NE + 1]))

        # Clamp + lane-aligned stores.  Row-pair i holds (even row 2i | odd row
        # 2i+1) side by side, so the HBM result is already row-interleaved.
        o_ref[:, :, :WBP] = jnp.clip(pe, MIN_VALUE, MAX_VALUE)
        o_ref[:, :, WBP:] = jnp.clip(po, MIN_VALUE, MAX_VALUE)

    return kernel


@jax.jit
def model_forward(x_nchw, w_all, bias_row):
    """x_nchw: (N, 3, H, W) f32; w_all/bias_row from build_params()."""
    N, _, Hi, Wi = x_nchw.shape
    HO, WO, NE, _, WBP = _derive_dims(Hi, Wi)
    KDIM = 3 * Wi * CIN

    # Batch grouping: keep >= 2 grid steps when possible (both v7x TensorCores
    # busy); each step folds NB images into the matmul M dimension to amortize
    # the per-grid-step overhead on v5e/v6e.
    if N >= 2 and N % 2 == 0:
        NB = N // 2
    else:
        NB = N
    n_groups = N // NB

    # Layout plumbing only: NCHW -> (N, Hi, Wi*CIN) rows, 2 zero halo rows, and
    # the K=144 LHS built from the three H-shifted row windows (ReLU is applied
    # inside the kernel).
    x = jnp.transpose(x_nchw, (0, 2, 3, 1)).astype(jnp.float32).reshape(N, Hi, Wi * CIN)
    xp = jnp.pad(x, ((0, 0), (2, 2), (0, 0)))                        # (N, Hi+4, Wi*CIN)
    lhs = jnp.concatenate([xp[:, 0:Hi + 2], xp[:, 1:Hi + 3], xp[:, 2:Hi + 4]], axis=-1)

    kernel = _make_kernel(Hi, Wi, NB, WBP, NE)
    out = pl.pallas_call(
        kernel,
        out_shape=jax.ShapeDtypeStruct((N, NE, 2 * WBP), jnp.float32),
        grid_spec=pltpu.PrefetchScalarGridSpec(
            num_scalar_prefetch=0,
            grid=(n_groups,),
            in_specs=[
                pl.BlockSpec((NB, Hi + 2, KDIM), lambda g: (g, 0, 0)),
                # Constant across the grid -> fetched once.
                # TODO(synk): for large Wi, tile w_all's columns over an extra grid
                # axis and single-buffer it (v7x has only 64 MiB physical VMEM).
                pl.BlockSpec((KDIM, 2 * WBP), lambda g: (0, 0)),
                pl.BlockSpec((1, 2 * WBP), lambda g: (0, 0)),
            ],
            out_specs=pl.BlockSpec((NB, NE, 2 * WBP), lambda g: (g, 0, 0)),
        ),
        compiler_params=pltpu.CompilerParams(dimension_semantics=("parallel",)),
    )(lhs, w_all, bias_row)

    # Row interleave is already realized in HBM by the (pair, phase) packing:
    # (N, NE, 2*WBP) -> (N, 2*NE, WBP) is a free reshape.  Trim halo/pad lanes,
    # drop the spurious last row, and restore NCHW (one fused XLA copy).
    out = out.reshape(N, 2 * NE, WBP)[:, :HO, COUT:COUT + WO * COUT]
    out = out.reshape(N, HO, WO, COUT)
    return jnp.transpose(out, (0, 3, 1, 2))


def _reference(x_nchw, w_pt, b_pt):
    """Pure-JAX reference (lax conv + reduce_window) for validation."""
    xr = jnp.maximum(x_nchw, 0.0)
    w_oihw = jnp.transpose(w_pt[:, :, ::-1, ::-1], (1, 0, 2, 3))      # (COUT, CIN, K, K)
    conv = jax.lax.conv_general_dilated(
        xr, w_oihw, window_strides=(1, 1),
        padding=((PADAMT, PADAMT), (PADAMT, PADAMT)),
        lhs_dilation=(STRIDE, STRIDE),
        dimension_numbers=("NCHW", "OIHW", "NCHW"),
    ) + b_pt.reshape(1, COUT, 1, 1)
    pooled = jax.lax.reduce_window(
        conv, -jnp.inf, jax.lax.max,
        window_dimensions=(1, 1, POOL_K, POOL_K),
        window_strides=(1, 1, 1, 1),
        padding=((0, 0), (0, 0), (1, 1), (1, 1)),
    )
    return jnp.clip(pooled, MIN_VALUE, MAX_VALUE)


if __name__ == "__main__":
    key = jax.random.PRNGKey(0)
    kx, kw_key, kb_key = jax.random.split(key, 3)

    # Small shapes consistent with the module: batch=2, channels=3, spatial=16x16.
    N, Hi, Wi = 2, 16, 16
    x = jax.random.normal(kx, (N, CIN, Hi, Wi), jnp.float32)

    # Deterministic parameter init (ConvTranspose2d weight layout: (in, out, kH, kW)).
    fan = CIN * K * K
    bound = 1.0 / math.sqrt(fan)
    w = jax.random.uniform(kw_key, (CIN, COUT, K, K), jnp.float32, -bound, bound)
    b = jax.random.uniform(kb_key, (COUT,), jnp.float32, -bound, bound)

    # One-time weight preparation (kept out of the per-call jitted forward).
    w_all, bias_row = build_params(w, b, Wi)

    out = jax.block_until_ready(model_forward(x, w_all, bias_row))
    ref = jax.block_until_ready(_reference(x, w, b))

    assert out.shape == (N, COUT, 2 * Hi + 1, 2 * Wi + 1), out.shape
    np.testing.assert_allclose(np.asarray(out), np.asarray(ref), rtol=1e-4, atol=1e-4)

    print("KERNEL_OK")
</pallas_src>

<mosaic_0001>
module attributes {stable_mosaic.version = 11 : i64} {
  func.func @kernel(%arg0: i32, %arg1: memref<1x18x144xf32, #tpu.memory_space<vmem>>, %arg2: memref<144x2304xf32, #tpu.memory_space<vmem>>, %arg3: memref<1x2304xf32, #tpu.memory_space<vmem>>, %arg4: memref<1x17x2304xf32, #tpu.memory_space<vmem>>) attributes {dimension_semantics = [#tpu.dimension_semantics<parallel>], iteration_bounds = array<i64: 2>, scalar_prefetch = 0 : i64, scratch_operands = 0 : i64, tpu.core_type = #tpu.core_type<tc>, window_params = [{transform_indices = @transform_0, window_bounds = array<i64: 1, 18, 144>}, {pipeline_mode = #tpu.pipeline_mode<synchronous>, transform_indices = @transform_1, window_bounds = array<i64: 144, 2304>}, {pipeline_mode = #tpu.pipeline_mode<synchronous>, transform_indices = @transform_2, window_bounds = array<i64: 1, 2304>}, {transform_indices = @transform_3, window_bounds = array<i64: 1, 17, 2304>}]} {
    %c0 = arith.constant 0 : index
    %c0_0 = arith.constant 0 : index
    %c0_1 = arith.constant 0 : index
    %0 = vector.load %arg1[%c0, %c0_0, %c0_1] : memref<1x18x144xf32, #tpu.memory_space<vmem>>, vector<1x18x144xf32>
    %cst = arith.constant 0.000000e+00 : f32
    %1 = vector.broadcast %cst : f32 to vector<1x18x144xf32>
    %2 = arith.maximumf %0, %1 : vector<1x18x144xf32>
    %3 = vector.shape_cast %2 : vector<1x18x144xf32> to vector<18x144xf32>
    %c0_2 = arith.constant 0 : index
    %c0_3 = arith.constant 0 : index
    %4 = vector.load %arg2[%c0_2, %c0_3] : memref<144x2304xf32, #tpu.memory_space<vmem>>, vector<144x2304xf32>
    %cst_4 = arith.constant dense<0.000000e+00> : vector<18x2304xf32>
    %5 = tpu.matmul %3, %4, %cst_4 {dimension_numbers = #tpu.dot_dimension_numbers<[1], [0], [0], [1], [0, 0, 1, 1], [], []>} : vector<18x144xf32>, vector<144x2304xf32>, vector<18x2304xf32> -> vector<18x2304xf32>
    %c0_5 = arith.constant 0 : index
    %c0_6 = arith.constant 0 : index
    %6 = vector.load %arg3[%c0_5, %c0_6] : memref<1x2304xf32, #tpu.memory_space<vmem>>, vector<1x2304xf32>
    %7 = vector.broadcast %6 : vector<1x2304xf32> to vector<18x2304xf32>
    %8 = arith.addf %5, %7 : vector<18x2304xf32>
    %c32_i32 = arith.constant 32 : i32
    %9 = tpu.dynamic_rotate %8 by %c32_i32 dim 1 : vector<18x2304xf32>, i32 -> vector<18x2304xf32>
    %c2272_i32 = arith.constant 2272 : i32
    %10 = tpu.dynamic_rotate %8 by %c2272_i32 dim 1 : vector<18x2304xf32>, i32 -> vector<18x2304xf32>
    %11 = arith.maximumf %9, %10 : vector<18x2304xf32>
    %12 = arith.maximumf %8, %11 : vector<18x2304xf32>
    %13 = vector.shape_cast %12 : vector<18x2304xf32> to vector<1x18x2304xf32>
    %14 = vector.extract_strided_slice %13 {offsets = [0, 0, 0], sizes = [1, 18, 1152], strides = [1, 1, 1]} : vector<1x18x2304xf32> to vector<1x18x1152xf32>
    %15 = vector.extract_strided_slice %13 {offsets = [0, 0, 1152], sizes = [1, 18, 1152], strides = [1, 1, 1]} : vector<1x18x2304xf32> to vector<1x18x1152xf32>
    %16 = tpu.iota {dimensions = array<i32: 1>} : vector<1x18x1152xi32>
    %c1_i32 = arith.constant 1 : i32
    %17 = vector.broadcast %c1_i32 : i32 to vector<1x18x1152xi32>
    %18 = arith.cmpi sge, %16, %17 : vector<1x18x1152xi32>
    %c16_i32 = arith.constant 16 : i32
    %19 = vector.broadcast %c16_i32 : i32 to vector<1x18x1152xi32>
    %20 = arith.cmpi sle, %16, %19 : vector<1x18x1152xi32>
    %21 = arith.andi %18, %20 : vector<1x18x1152xi1>
    %cst_7 = arith.constant -1.000000e+30 : f32
    %22 = vector.broadcast %cst_7 : f32 to vector<1x18x1152xf32>
    %23 = arith.select %21, %15, %22 : vector<1x18x1152xi1>, vector<1x18x1152xf32>
    %24 = vector.extract_strided_slice %14 {offsets = [0, 0, 0], sizes = [1, 17, 1152], strides = [1, 1, 1]} : vector<1x18x1152xf32> to vector<1x17x1152xf32>
    %25 = vector.extract_strided_slice %23 {offsets = [0, 0, 0], sizes = [1, 17, 1152], strides = [1, 1, 1]} : vector<1x18x1152xf32> to vector<1x17x1152xf32>
    %26 = vector.extract_strided_slice %23 {offsets = [0, 1, 0], sizes = [1, 17, 1152], strides = [1, 1, 1]} : vector<1x18x1152xf32> to vector<1x17x1152xf32>
    %27 = arith.maximumf %25, %26 : vector<1x17x1152xf32>
    %28 = arith.maximumf %24, %27 : vector<1x17x1152xf32>
    %29 = vector.extract_strided_slice %23 {offsets = [0, 1, 0], sizes = [1, 17, 1152], strides = [1, 1, 1]} : vector<1x18x1152xf32> to vector<1x17x1152xf32>
    %30 = vector.extract_strided_slice %14 {offsets = [0, 0, 0], sizes = [1, 17, 1152], strides = [1, 1, 1]} : vector<1x18x1152xf32> to vector<1x17x1152xf32>
    %31 = vector.extract_strided_slice %14 {offsets = [0, 1, 0], sizes = [1, 17, 1152], strides = [1, 1, 1]} : vector<1x18x1152xf32> to vector<1x17x1152xf32>
    %32 = arith.maximumf %30, %31 : vector<1x17x1152xf32>
    %33 = arith.maximumf %29, %32 : vector<1x17x1152xf32>
    %cst_8 = arith.constant 0.000000e+00 : f32
    %cst_9 = arith.constant 6.400000e+00 : f32
    %34 = vector.broadcast %cst_8 : f32 to vector<1x17x1152xf32>
    %35 = arith.maximumf %34, %28 : vector<1x17x1152xf32>
    %36 = vector.broadcast %cst_9 : f32 to vector<1x17x1152xf32>
    %37 = arith.minimumf %36, %35 : vector<1x17x1152xf32>
    %c0_10 = arith.constant 0 : index
    %c0_11 = arith.constant 0 : index
    %c0_12 = arith.constant 0 : index
    %38 = vector.load %arg4[%c0_10, %c0_11, %c0_12] : memref<1x17x2304xf32, #tpu.memory_space<vmem>>, vector<1x17x1152xf32>
    tpu.vector_store %arg4[%c0_10, %c0_11, %c0_12], %37 {strides = array<i32>} : memref<1x17x2304xf32, #tpu.memory_space<vmem>>, vector<1x17x1152xf32>,
    %cst_13 = arith.constant 0.000000e+00 : f32
    %cst_14 = arith.constant 6.400000e+00 : f32
    %39 = vector.broadcast %cst_13 : f32 to vector<1x17x1152xf32>
    %40 = arith.maximumf %39, %33 : vector<1x17x1152xf32>
    %41 = vector.broadcast %cst_14 : f32 to vector<1x17x1152xf32>
    %42 = arith.minimumf %41, %40 : vector<1x17x1152xf32>
    %c0_15 = arith.constant 0 : index
    %c0_16 = arith.constant 0 : index
    %c1152 = arith.constant 1152 : index
    %43 = vector.load %arg4[%c0_15, %c0_16, %c1152] : memref<1x17x2304xf32, #tpu.memory_space<vmem>>, vector<1x17x1152xf32>
    tpu.vector_store %arg4[%c0_15, %c0_16, %c1152], %42 {strides = array<i32>} : memref<1x17x2304xf32, #tpu.memory_space<vmem>>, vector<1x17x1152xf32>,
    return
  }
  func.func @transform_0(%arg0: i32) -> (i32, i32, i32) {
    %c0_i32 = arith.constant 0 : i32
    %c0_i32_0 = arith.constant 0 : i32
    %c0_i32_1 = arith.constant 0 : i32
    return %arg0, %c0_i32, %c0_i32_0 : i32, i32, i32
  }
  func.func @transform_1(%arg0: i32) -> (i32, i32) {
    %c0_i32 = arith.constant 0 : i32
    %c0_i32_0 = arith.constant 0 : i32
    %c0_i32_1 = arith.constant 0 : i32
    return %c0_i32, %c0_i32_0 : i32, i32
  }
  func.func @transform_2(%arg0: i32) -> (i32, i32) {
    %c0_i32 = arith.constant 0 : i32
    %c0_i32_0 = arith.constant 0 : i32
    %c0_i32_1 = arith.constant 0 : i32
    return %c0_i32, %c0_i32_0 : i32, i32
  }
  func.func @transform_3(%arg0: i32) -> (i32, i32, i32) {
    %c0_i32 = arith.constant 0 : i32
    %c0_i32_0 = arith.constant 0 : i32
    %c0_i32_1 = arith.constant 0 : i32
    return %arg0, %c0_i32, %c0_i32_0 : i32, i32, i32
  }
}

</mosaic_0001>

<llo_original>
// kernel: model_forward.1
$region0: #{model_forward.1}
  #allocation0 [shape = 'u32[]', space=smem, size = 0x4, offset = 0x4, fixed_abs, tag = 'smem constant byte address 0x4 - core index']
  #allocation1 [shape = 'u32[144,128]{1,0:T(1,128)}', space=vmem, size = 0x12000, scoped, tag = 'internal scratch']
  %s0 = inlined_call_operand.vmem [shape: f32[2,18,144], index: 0, kind: input, shape index: {}]
  %s1 = inlined_call_operand.hbm [shape: f32[144,2304], index: 1, kind: input, shape index: {}]
  %s2 = inlined_call_operand.hbm [shape: f32[1,2304], index: 2, kind: input, shape index: {}]
  %s3 = inlined_call_operand.vmem [shape: f32[2,17,2304], index: 3, kind: output, shape index: {}]
  %s4 = sld [smem:[#allocation0]]
  $region53: #{model_forward.1} parent=0
    _
  %s6 = ssub.s32 1, %s4
  %s7 = scalar_select 0, %s6, %s4
  $region1: #{model_forward.1} parent=0
    #allocation2 [shape = 'u8[1327104]{0}', space=vmem, size = 0x144000, scoped, tag = 'input window, operand 1, single buffered']
    #allocation3 [shape = 's32[2]{0}', space=sflag, size = 0x8, scoped, tag = 'scoped memory for model_forward.1']
    #allocation4 [shape = 'u8[9216]{0}', space=vmem, size = 0x2400, scoped, tag = 'input window, operand 2, single buffered']
    #allocation5 [shape = 's32[1]{0}', space=sflag, size = 0x4, scoped, tag = 'scoped memory for model_forward.1']
    %8 = vsyncpa [#allocation3], 0
    %9 = vsyncpa [#allocation5], 0
    loop: start=0, step=1, limit=4
    $region2: #{model_forward.1} parent=1 // loop_pre_header
      _
    $region3: #{model_forward.1} parent=1 // loop_header
      %s11 = sphi 0, %s15
      %p12 = scmp.ge.s32.totalorder %s11, 4
      %s21 = sphi 0, %s23
      %s24 = sphi 0, %s21
      %s25 = sphi 0, %s24
      %s41 = sphi 0, %s25
      %s45 = sphi 0, %s45
      %s47 = sphi 0, %s45
      %s48 = sphi 0, %s47
      %s62 = sphi 0, %s48
      %s66 = sphi 0, %s66
      %s68 = sphi 0, %s66
      %s69 = sphi 0, %s68
      %s83 = sphi 0, %s69
      %s89 = sphi 0, %s91
      %s92 = sphi 0, %s89
      %s93 = sphi 0, %s92
      %s109 = sphi 0, %s93
    $region4: #{model_forward.1} parent=1 // loop_header_branch
      %14 = sbr.rel (%p12) target = $region8
    $region5: #{model_forward.1} parent=1 // loop_body
      %s16 = ssub.s32 %s11, 1
      %s17 = ssub.s32 %s11, 2
      %s18 = sadd.s32 %s11, 1
      %s19 = ssub.s32 %s11, %s18
      %p20 = scmp.eq.s32.totalorder %s19, 0
      %s22 = sadd.s32 %s21, 1
      %s23 = scalar_select %p20, %s21, %s22
      %p26 = pneg %p20
      %p27 = scmp.eq.s32.totalorder %s11, 1
      %p28 = por %p26, %p27
      %p29 = scmp.ne.s32.totalorder %s21, %s24
      %p30 = scmp.eq.s32.totalorder %s11, 0
      %p31 = por %p29, %p30
      %p32 = scmp.ne.s32.totalorder %s21, %s24
      %p33 = scmp.eq.s32.totalorder %s16, 1
      %p34 = por %p32, %p33
      %p35 = scmp.ne.s32.totalorder %s24, %s25
      %p36 = scmp.eq.s32.totalorder %s16, 0
      %p37 = por %p35, %p36
      %p38 = scmp.ne.s32.totalorder %s24, %s25
      %p39 = scmp.eq.s32.totalorder %s17, 1
      %p40 = por %p38, %p39
      %p42 = scmp.ne.s32.totalorder %s25, %s41
      %p43 = scmp.eq.s32.totalorder %s17, 0
      %p44 = por %p42, %p43
      %s46 = sadd.s32 %s45, 1
      %p49 = scmp.eq.s32.totalorder %s11, 1
      %p50 = scmp.ne.s32.totalorder %s45, %s47
      %p51 = scmp.eq.s32.totalorder %s11, 0
      %p52 = por %p50, %p51
      %p53 = scmp.ne.s32.totalorder %s45, %s47
      %p54 = scmp.eq.s32.totalorder %s16, 1
      %p55 = por %p53, %p54
      %p56 = scmp.ne.s32.totalorder %s47, %s48
      %p57 = scmp.eq.s32.totalorder %s16, 0
      %p58 = por %p56, %p57
      %p59 = scmp.ne.s32.totalorder %s47, %s48
      %p60 = scmp.eq.s32.totalorder %s17, 1
      %p61 = por %p59, %p60
      %p63 = scmp.ne.s32.totalorder %s48, %s62
      %p64 = scmp.eq.s32.totalorder %s17, 0
      %p65 = por %p63, %p64
      %s67 = sadd.s32 %s66, 1
      %p70 = scmp.eq.s32.totalorder %s11, 1
      %p71 = scmp.ne.s32.totalorder %s66, %s68
      %p72 = scmp.eq.s32.totalorder %s11, 0
      %p73 = por %p71, %p72
      %p74 = scmp.ne.s32.totalorder %s66, %s68
      %p75 = scmp.eq.s32.totalorder %s16, 1
      %p76 = por %p74, %p75
      %p77 = scmp.ne.s32.totalorder %s68, %s69
      %p78 = scmp.eq.s32.totalorder %s16, 0
      %p79 = por %p77, %p78
      %p80 = scmp.ne.s32.totalorder %s68, %s69
      %p81 = scmp.eq.s32.totalorder %s17, 1
      %p82 = por %p80, %p81
      %p84 = scmp.ne.s32.totalorder %s69, %s83
      %p85 = scmp.eq.s32.totalorder %s17, 0
      %p86 = por %p84, %p85
      %s87 = ssub.s32 %s11, %s18
      %p88 = scmp.eq.s32.totalorder %s87, 0
      %s90 = sadd.s32 %s89, 1
      %s91 = scalar_select %p88, %s89, %s90
      %p94 = pneg %p88
      %p95 = scmp.eq.s32.totalorder %s11, 1
      %p96 = por %p94, %p95
      %p97 = scmp.ne.s32.totalorder %s89, %s92
      %p98 = scmp.eq.s32.totalorder %s11, 0
      %p99 = por %p97, %p98
      %p100 = scmp.ne.s32.totalorder %s89, %s92
      %p101 = scmp.eq.s32.totalorder %s16, 1
      %p102 = por %p100, %p101
      %p103 = scmp.ne.s32.totalorder %s92, %s93
      %p104 = scmp.eq.s32.totalorder %s16, 0
      %p105 = por %p103, %p104
      %p106 = scmp.ne.s32.totalorder %s92, %s93
      %p107 = scmp.eq.s32.totalorder %s17, 1
      %p108 = por %p106, %p107
      %p110 = scmp.ne.s32.totalorder %s93, %s109
      %p111 = scmp.eq.s32.totalorder %s17, 0
      %p112 = por %p110, %p111
      %p113 = scmp.le.s32.totalorder 1, %s11
      %p114 = scmp.lt.s32.totalorder %s11, 3
      %p115 = pnand %p113, %p114
      %p116 = pneg %p115
      // Predicated region
      $region9: #{model_forward.1} parent=5 // pred_check
        _
      $region10: #{model_forward.1} parent=5 // pred_check_branch
        %118 = sbr.rel (%p115) target = $region12
      $region11: #{model_forward.1} parent=5 // pred_region
        %s119 = ssub.s32 %s11, 1
        // Predicated region
        $region13: #{model_forward.1} parent=11 // pred_check
          %p120 = pneg %p58
        $region14: #{model_forward.1} parent=11 // pred_check_branch
          %122 = sbr.rel (%p120) target = $region16
        $region15: #{model_forward.1} parent=11 // pred_region
          %s124 = ssub.s32 41472, 41472
          %125 = vsyncadd [#allocation3], %s124
          %s126 = sshll.u32 [#allocation2], 4
          %s127 = int_to_ptr.vmem [resolvable:$true] %s126
          %132 = dma.hbm_to_vmem [thread:$0]  %s1, 41472, %s127, [#allocation3], 2304, 2304, 144
        $region16: #{model_forward.1} parent=11 // pred_fallthru
          _
        // Predicated region
        $region17: #{model_forward.1} parent=11 // pred_check
          %p133 = pneg %p79
        $region18: #{model_forward.1} parent=11 // pred_check_branch
          %135 = sbr.rel (%p133) target = $region20
        $region19: #{model_forward.1} parent=11 // pred_region
          %s137 = ssub.s32 288, 288
          %138 = vsyncadd [#allocation5], %s137
          %s140 = sshll.u32 [#allocation4], 4
          %s141 = int_to_ptr.vmem [resolvable:$true] %s140
          %143 = dma.hbm_to_vmem [thread:$0]  %s2, 288, %s141, [#allocation5]
        $region20: #{model_forward.1} parent=11 // pred_fallthru
          _
      $region12: #{model_forward.1} parent=5 // pred_fallthru
        _
      %p144 = scmp.lt.s32.totalorder %s11, 2
      // Predicated region
      $region21: #{model_forward.1} parent=5 // pred_check
        %p145 = pneg %p144
      $region22: #{model_forward.1} parent=5 // pred_check_branch
        %147 = sbr.rel (%p145) target = $region24
      $region23: #{model_forward.1} parent=5 // pred_region
        // Predicated region
        $region25: #{model_forward.1} parent=23 // pred_check
          %p148 = pneg %p31
        $region26: #{model_forward.1} parent=23 // pred_check_branch
          %150 = sbr.rel (%p148) target = $region28
        $region27: #{model_forward.1} parent=23 // pred_region
          %p151 = scmp.lt.s32.totalorder %s11, 1
          %s152 = scalar_select %p151, %s11, 1
          %s153 = smul.addr %s152, 6
          %s154 = smul.addr %s153, 8
          %s155 = scalar_lea.vmem %s0, %s154
        $region28: #{model_forward.1} parent=23 // pred_fallthru
          _
      $region24: #{model_forward.1} parent=5 // pred_fallthru
        _
      %p156 = scmp.le.s32.totalorder 1, %s11
      %p157 = scmp.lt.s32.totalorder %s11, 3
      %p158 = pnand %p156, %p157
      %p159 = pneg %p158
      // Predicated region
      $region29: #{model_forward.1} parent=5 // pred_check
        _
      $region30: #{model_forward.1} parent=5 // pred_check_branch
        %161 = sbr.rel (%p158) target = $region32
      $region31: #{model_forward.1} parent=5 // pred_region
        %s162 = ssub.s32 %s11, 1
        // Predicated region
        $region33: #{model_forward.1} parent=31 // pred_check
          %p163 = pneg %p58
        $region34: #{model_forward.1} parent=31 // pred_check_branch
          %165 = sbr.rel (%p163) target = $region36
        $region35: #{model_forward.1} parent=31 // pred_region
          %166 = dma.done [#allocation3], 41472
        $region36: #{model_forward.1} parent=31 // pred_fallthru
          _
        // Predicated region
        $region37: #{model_forward.1} parent=31 // pred_check
          %p167 = pneg %p79
        $region38: #{model_forward.1} parent=31 // pred_check_branch
          %169 = sbr.rel (%p167) target = $region40
        $region39: #{model_forward.1} parent=31 // pred_region
          %170 = dma.done [#allocation5], 288
        $region40: #{model_forward.1} parent=31 // pred_fallthru
          _
        %p171 = scmp.lt.s32.totalorder %s16, 1
        %s172 = scalar_select %p171, %s16, 1
        %s173 = smul.addr %s172, 6
        %s174 = smul.addr %s173, 8
        %s175 = scalar_lea.vmem %s0, %s174
        %p176 = pneg %p37
        %p177 = pneg %p34
        %p178 = pneg %p58
        %p179 = pneg %p55
        %p180 = pneg %p79
        %p181 = pneg %p76
        %p182 = pneg %p105
        %p183 = pneg %p102
        %p184 = scmp.lt.s32.totalorder %s16, 1
        %s185 = scalar_select %p184, %s16, 1
        %s186 = smul.addr %s185, 54
        %s187 = smul.addr %s186, 8
        %s188 = scalar_lea.vmem %s3, %s187
        %p189 = scmp.lt.s32.totalorder %s16, 1
        %s190 = scalar_select %p189, %s16, 1
        %s191 = smul.addr %s190, 6
        %s192 = smul.addr %s191, 8
        %s193 = scalar_lea.vmem %s0, %s192
        %p194 = scmp.lt.s32.totalorder %s16, 1
        %s195 = scalar_select %p194, %s16, 1
        %s196 = smul.addr %s195, 54
        %s197 = smul.addr %s196, 8
        %s198 = scalar_lea.vmem %s3, %s197
        %v199 = vld [vmem:[%s193] sm:$0xff]
        %v200 = vld [vmem:[%s193 + $0x8] sm:$0xff]
        %v201 = vld [vmem:[%s193 + $0x10] sm:$0xff]
        %v202 = vld [vmem:[%s193 + $0x18] sm:$0xff]
        %v203 = vld [vmem:[%s193 + $0x20] sm:$0x3]
        %v204 = vld [vmem:[%s193 + $0x28] sm:$0x3]
        %v205 = vmax.f32 %v199, 0.0
        %v206 = vmax.f32 %v200, 0.0
        %v207 = vmax.f32 %v201, 0.0
        %v208 = vmax.f32 %v202, 0.0
        %v209 = vmax.f32 %v203, 0.0
        %v210 = vmax.f32 %v204, 0.0
        %v211 = vld [vmem:[#allocation2] sm:$0xff]
        %v212 = vld [vmem:[#allocation2 + $0x8] sm:$0xff]
        %v213 = vld [vmem:[#allocation2 + $0x10] sm:$0xff]
        %v214 = vld [vmem:[#allocation2 + $0x18] sm:$0xff]
        %v215 = vld [vmem:[#allocation2 + $0x20] sm:$0xff]
        %v216 = vld [vmem:[#allocation2 + $0x28] sm:$0xff]
        %v217 = vld [vmem:[#allocation2 + $0x30] sm:$0xff]
        %v218 = vld [vmem:[#allocation2 + $0x38] sm:$0xff]
        %v219 = vld [vmem:[#allocation2 + $0x40] sm:$0xff]
        %v220 = vld [vmem:[#allocation2 + $0x48] sm:$0xff]
        %v221 = vld [vmem:[#allocation2 + $0x50] sm:$0xff]
        %v222 = vld [vmem:[#allocation2 + $0x58] sm:$0xff]
        %v223 = vld [vmem:[#allocation2 + $0x60] sm:$0xff]
        %v224 = vld [vmem:[#allocation2 + $0x68] sm:$0xff]
        %v225 = vld [vmem:[#allocation2 + $0x70] sm:$0xff]
        %v226 = vld [vmem:[#allocation2 + $0x78] sm:$0xff]
        %v227 = vld [vmem:[#allocation2 + $0x80] sm:$0xff]
        %v228 = vld [vmem:[#allocation2 + $0x88] sm:$0xff]
        %v229 = vld [vmem:[#allocation2 + $0x90] sm:$0xff]
        %v230 = vld [vmem:[#allocation2 + $0x98] sm:$0xff]
        %v231 = vld [vmem:[#allocation2 + $0xa0] sm:$0xff]
        %v232 = vld [vmem:[#allocation2 + $0xa8] sm:$0xff]
        %v233 = vld [vmem:[#allocation2 + $0xb0] sm:$0xff]
        %v234 = vld [vmem:[#allocation2 + $0xb8] sm:$0xff]
        %v235 = vld [vmem:[#allocation2 + $0xc0] sm:$0xff]
        %v236 = vld [vmem:[#allocation2 + $0xc8] sm:$0xff]
        %v237 = vld [vmem:[#allocation2 + $0xd0] sm:$0xff]
        %v238 = vld [vmem:[#allocation2 + $0xd8] sm:$0xff]
        %v239 = vld [vmem:[#allocation2 + $0xe0] sm:$0xff]
        %v240 = vld [vmem:[#allocation2 + $0xe8] sm:$0xff]
        %v241 = vld [vmem:[#allocation2 + $0xf0] sm:$0xff]
        %v242 = vld [vmem:[#allocation2 + $0xf8] sm:$0xff]
        %v243 = vld [vmem:[#allocation2 + $0x100] sm:$0xff]
        %v244 = vld [vmem:[#allocation2 + $0x108] sm:$0xff]
        %v245 = vld [vmem:[#allocation2 + $0x110] sm:$0xff]
        %v246 = vld [vmem:[#allocation2 + $0x118] sm:$0xff]
        %v247 = vld [vmem:[#allocation2 + $0x120] sm:$0xff]
        %v248 = vld [vmem:[#allocation2 + $0x128] sm:$0xff]
        %v249 = vld [vmem:[#allocation2 + $0x130] sm:$0xff]
        %v250 = vld [vmem:[#allocation2 + $0x138] sm:$0xff]
        %v251 = vld [vmem:[#allocation2 + $0x140] sm:$0xff]
        %v252 = vld [vmem:[#allocation2 + $0x148] sm:$0xff]
        %v253 = vld [vmem:[#allocation2 + $0x150] sm:$0xff]
        %v254 = vld [vmem:[#allocation2 + $0x158] sm:$0xff]
        %v255 = vld [vmem:[#allocation2 + $0x160] sm:$0xff]
        %v256 = vld [vmem:[#allocation2 + $0x168] sm:$0xff]
        %v257 = vld [vmem:[#allocation2 + $0x170] sm:$0xff]
        %v258 = vld [vmem:[#allocation2 + $0x178] sm:$0xff]
        %v259 = vld [vmem:[#allocation2 + $0x180] sm:$0xff]
        %v260 = vld [vmem:[#allocation2 + $0x188] sm:$0xff]
        %v261 = vld [vmem:[#allocation2 + $0x190] sm:$0xff]
        %v262 = vld [vmem:[#allocation2 + $0x198] sm:$0xff]
        %v263 = vld [vmem:[#allocation2 + $0x1a0] sm:$0xff]
        %v264 = vld [vmem:[#allocation2 + $0x1a8] sm:$0xff]
        %v265 = vld [vmem:[#allocation2 + $0x1b0] sm:$0xff]
        %v266 = vld [vmem:[#allocation2 + $0x1b8] sm:$0xff]
        %v267 = vld [vmem:[#allocation2 + $0x1c0] sm:$0xff]
        %v268 = vld [vmem:[#allocation2 + $0x1c8] sm:$0xff]
        %v269 = vld [vmem:[#allocation2 + $0x1d0] sm:$0xff]
        %v270 = vld [vmem:[#allocation2 + $0x1d8] sm:$0xff]
        %v271 = vld [vmem:[#allocation2 + $0x1e0] sm:$0xff]
        %v272 = vld [vmem:[#allocation2 + $0x1e8] sm:$0xff]
        %v273 = vld [vmem:[#allocation2 + $0x1f0] sm:$0xff]
        %v274 = vld [vmem:[#allocation2 + $0x1f8] sm:$0xff]
        %v275 = vld [vmem:[#allocation2 + $0x200] sm:$0xff]
        %v276 = vld [vmem:[#allocation2 + $0x208] sm:$0xff]
        %v277 = vld [vmem:[#allocation2 + $0x210] sm:$0xff]
        %v278 = vld [vmem:[#allocation2 + $0x218] sm:$0xff]
        %v279 = vld [vmem:[#allocation2 + $0x220] sm:$0xff]
        %v280 = vld [vmem:[#allocation2 + $0x228] sm:$0xff]
        %v281 = vld [vmem:[#allocation2 + $0x230] sm:$0xff]
        %v282 = vld [vmem:[#allocation2 + $0x238] sm:$0xff]
        %v283 = vld [vmem:[#allocation2 + $0x240] sm:$0xff]
        %v284 = vld [vmem:[#allocation2 + $0x248] sm:$0xff]
        %v285 = vld [vmem:[#allocation2 + $0x250] sm:$0xff]
        %v286 = vld [vmem:[#allocation2 + $0x258] sm:$0xff]
        %v287 = vld [vmem:[#allocation2 + $0x260] sm:$0xff]
        %v288 = vld [vmem:[#allocation2 + $0x268] sm:$0xff]
        %v289 = vld [vmem:[#allocation2 + $0x270] sm:$0xff]
        %v290 = vld [vmem:[#allocation2 + $0x278] sm:$0xff]
        %v291 = vld [vmem:[#allocation2 + $0x280] sm:$0xff]
        %v292 = vld [vmem:[#allocation2 + $0x288] sm:$0xff]
        %v293 = vld [vmem:[#allocation2 + $0x290] sm:$0xff]
        %v294 = vld [vmem:[#allocation2 + $0x298] sm:$0xff]
        %v295 = vld [vmem:[#allocation2 + $0x2a0] sm:$0xff]
        %v296 = vld [vmem:[#allocation2 + $0x2a8] sm:$0xff]
        %v297 = vld [vmem:[#allocation2 + $0x2b0] sm:$0xff]
        %v298 = vld [vmem:[#allocation2 + $0x2b8] sm:$0xff]
        %v299 = vld [vmem:[#allocation2 + $0x2c0] sm:$0xff]
        %v300 = vld [vmem:[#allocation2 + $0x2c8] sm:$0xff]
        %v301 = vld [vmem:[#allocation2 + $0x2d0] sm:$0xff]
        %v302 = vld [vmem:[#allocation2 + $0x2d8] sm:$0xff]
        %v303 = vld [vmem:[#allocation2 + $0x2e0] sm:$0xff]
        %v304 = vld [vmem:[#allocation2 + $0x2e8] sm:$0xff]
        %v305 = vld [vmem:[#allocation2 + $0x2f0] sm:$0xff]
        %v306 = vld [vmem:[#allocation2 + $0x2f8] sm:$0xff]
        %v307 = vld [vmem:[#allocation2 + $0x300] sm:$0xff]
        %v308 = vld [vmem:[#allocation2 + $0x308] sm:$0xff]
        %v309 = vld [vmem:[#allocation2 + $0x310] sm:$0xff]
        %v310 = vld [vmem:[#allocation2 + $0x318] sm:$0xff]
        %v311 = vld [vmem:[#allocation2 + $0x320] sm:$0xff]
        %v312 = vld [vmem:[#allocation2 + $0x328] sm:$0xff]
        %v313 = vld [vmem:[#allocation2 + $0x330] sm:$0xff]
        %v314 = vld [vmem:[#allocation2 + $0x338] sm:$0xff]
        %v315 = vld [vmem:[#allocation2 + $0x340] sm:$0xff]
        %v316 = vld [vmem:[#allocation2 + $0x348] sm:$0xff]
        %v317 = vld [vmem:[#allocation2 + $0x350] sm:$0xff]
        %v318 = vld [vmem:[#allocation2 + $0x358] sm:$0xff]
        %v319 = vld [vmem:[#allocation2 + $0x360] sm:$0xff]
        %v320 = vld [vmem:[#allocation2 + $0x368] sm:$0xff]
        %v321 = vld [vmem:[#allocation2 + $0x370] sm:$0xff]
        %v322 = vld [vmem:[#allocation2 + $0x378] sm:$0xff]
        %v323 = vld [vmem:[#allocation2 + $0x380] sm:$0xff]
        %v324 = vld [vmem:[#allocation2 + $0x388] sm:$0xff]
        %v325 = vld [vmem:[#allocation2 + $0x390] sm:$0xff]
        %v326 = vld [vmem:[#allocation2 + $0x398] sm:$0xff]
        %v327 = vld [vmem:[#allocation2 + $0x3a0] sm:$0xff]
        %v328 = vld [vmem:[#allocation2 + $0x3a8] sm:$0xff]
        %v329 = vld [vmem:[#allocation2 + $0x3b0] sm:$0xff]
        %v330 = vld [vmem:[#allocation2 + $0x3b8] sm:$0xff]
        %v331 = vld [vmem:[#allocation2 + $0x3c0] sm:$0xff]
        %v332 = vld [vmem:[#allocation2 + $0x3c8] sm:$0xff]
        %v333 = vld [vmem:[#allocation2 + $0x3d0] sm:$0xff]
        %v334 = vld [vmem:[#allocation2 + $0x3d8] sm:$0xff]
        %v335 = vld [vmem:[#allocation2 + $0x3e0] sm:$0xff]
        %v336 = vld [vmem:[#allocation2 + $0x3e8] sm:$0xff]
        %v337 = vld [vmem:[#allocation2 + $0x3f0] sm:$0xff]
        %v338 = vld [vmem:[#allocation2 + $0x3f8] sm:$0xff]
        %v339 = vld [vmem:[#allocation2 + $0x400] sm:$0xff]
        %v340 = vld [vmem:[#allocation2 + $0x408] sm:$0xff]
        %v341 = vld [vmem:[#allocation2 + $0x410] sm:$0xff]
        %v342 = vld [vmem:[#allocation2 + $0x418] sm:$0xff]
        %v343 = vld [vmem:[#allocation2 + $0x420] sm:$0xff]
        %v344 = vld [vmem:[#allocation2 + $0x428] sm:$0xff]
        %v345 = vld [vmem:[#allocation2 + $0x430] sm:$0xff]
        %v346 = vld [vmem:[#allocation2 + $0x438] sm:$0xff]
        %v347 = vld [vmem:[#allocation2 + $0x440] sm:$0xff]
        %v348 = vld [vmem:[#allocation2 + $0x448] sm:$0xff]
        %v349 = vld [vmem:[#allocation2 + $0x450] sm:$0xff]
        %v350 = vld [vmem:[#allocation2 + $0x458] sm:$0xff]
        %v351 = vld [vmem:[#allocation2 + $0x460] sm:$0xff]
        %v352 = vld [vmem:[#allocation2 + $0x468] sm:$0xff]
        %v353 = vld [vmem:[#allocation2 + $0x470] sm:$0xff]
        %v354 = vld [vmem:[#allocation2 + $0x478] sm:$0xff]
        %v355 = vld [vmem:[#allocation2 + $0x480] sm:$0xff]
        %v356 = vld [vmem:[#allocation2 + $0x488] sm:$0xff]
        %v357 = vld [vmem:[#allocation2 + $0x490] sm:$0xff]
        %v358 = vld [vmem:[#allocation2 + $0x498] sm:$0xff]
        %v359 = vld [vmem:[#allocation2 + $0x4a0] sm:$0xff]
        %v360 = vld [vmem:[#allocation2 + $0x4a8] sm:$0xff]
        %v361 = vld [vmem:[#allocation2 + $0x4b0] sm:$0xff]
        %v362 = vld [vmem:[#allocation2 + $0x4b8] sm:$0xff]
        %v363 = vld [vmem:[#allocation2 + $0x4c0] sm:$0xff]
        %v364 = vld [vmem:[#allocation2 + $0x4c8] sm:$0xff]
        %v365 = vld [vmem:[#allocation2 + $0x4d0] sm:$0xff]
        %v366 = vld [vmem:[#allocation2 + $0x4d8] sm:$0xff]
        %v367 = vld [vmem:[#allocation2 + $0x4e0] sm:$0xff]
        %v368 = vld [vmem:[#allocation2 + $0x4e8] sm:$0xff]
        %v369 = vld [vmem:[#allocation2 + $0x4f0] sm:$0xff]
        %v370 = vld [vmem:[#allocation2 + $0x4f8] sm:$0xff]
        %v371 = vld [vmem:[#allocation2 + $0x500] sm:$0xff]
        %v372 = vld [vmem:[#allocation2 + $0x508] sm:$0xff]
        %v373 = vld [vmem:[#allocation2 + $0x510] sm:$0xff]
        %v374 = vld [vmem:[#allocation2 + $0x518] sm:$0xff]
        %v375 = vld [vmem:[#allocation2 + $0x520] sm:$0xff]
        %v376 = vld [vmem:[#allocation2 + $0x528] sm:$0xff]
        %v377 = vld [vmem:[#allocation2 + $0x530] sm:$0xff]
        %v378 = vld [vmem:[#allocation2 + $0x538] sm:$0xff]
        %v379 = vld [vmem:[#allocation2 + $0x540] sm:$0xff]
        %v380 = vld [vmem:[#allocation2 + $0x548] sm:$0xff]
        %v381 = vld [vmem:[#allocation2 + $0x550] sm:$0xff]
        %v382 = vld [vmem:[#allocation2 + $0x558] sm:$0xff]
        %v383 = vld [vmem:[#allocation2 + $0x560] sm:$0xff]
        %v384 = vld [vmem:[#allocation2 + $0x568] sm:$0xff]
        %v385 = vld [vmem:[#allocation2 + $0x570] sm:$0xff]
        %v386 = vld [vmem:[#allocation2 + $0x578] sm:$0xff]
        %v387 = vld [vmem:[#allocation2 + $0x580] sm:$0xff]
        %v388 = vld [vmem:[#allocation2 + $0x588] sm:$0xff]
        %v389 = vld [vmem:[#allocation2 + $0x590] sm:$0xff]
        %v390 = vld [vmem:[#allocation2 + $0x598] sm:$0xff]
        %v391 = vld [vmem:[#allocation2 + $0x5a0] sm:$0xff]
        %v392 = vld [vmem:[#allocation2 + $0x5a8] sm:$0xff]
        %v393 = vld [vmem:[#allocation2 + $0x5b0] sm:$0xff]
        %v394 = vld [vmem:[#allocation2 + $0x5b8] sm:$0xff]
        %v395 = vld [vmem:[#allocation2 + $0x5c0] sm:$0xff]
        %v396 = vld [vmem:[#allocation2 + $0x5c8] sm:$0xff]
        %v397 = vld [vmem:[#allocation2 + $0x5d0] sm:$0xff]
        %v398 = vld [vmem:[#allocation2 + $0x5d8] sm:$0xff]
        %v399 = vld [vmem:[#allocation2 + $0x5e0] sm:$0xff]
        %v400 = vld [vmem:[#allocation2 + $0x5e8] sm:$0xff]
        %v401 = vld [vmem:[#allocation2 + $0x5f0] sm:$0xff]
        %v402 = vld [vmem:[#allocation2 + $0x5f8] sm:$0xff]
        %v403 = vld [vmem:[#allocation2 + $0x600] sm:$0xff]
        %v404 = vld [vmem:[#allocation2 + $0x608] sm:$0xff]
        %v405 = vld [vmem:[#allocation2 + $0x610] sm:$0xff]
        %v406 = vld [vmem:[#allocation2 + $0x618] sm:$0xff]
        %v407 = vld [vmem:[#allocation2 + $0x620] sm:$0xff]
        %v408 = vld [vmem:[#allocation2 + $0x628] sm:$0xff]
        %v409 = vld [vmem:[#allocation2 + $0x630] sm:$0xff]
        %v410 = vld [vmem:[#allocation2 + $0x638] sm:$0xff]
        %v411 = vld [vmem:[#allocation2 + $0x640] sm:$0xff]
        %v412 = vld [vmem:[#allocation2 + $0x648] sm:$0xff]
        %v413 = vld [vmem:[#allocation2 + $0x650] sm:$0xff]
        %v414 = vld [vmem:[#allocation2 + $0x658] sm:$0xff]
        %v415 = vld [vmem:[#allocation2 + $0x660] sm:$0xff]
        %v416 = vld [vmem:[#allocation2 + $0x668] sm:$0xff]
        %v417 = vld [vmem:[#allocation2 + $0x670] sm:$0xff]
        %v418 = vld [vmem:[#allocation2 + $0x678] sm:$0xff]
        %v419 = vld [vmem:[#allocation2 + $0x680] sm:$0xff]
        %v420 = vld [vmem:[#allocation2 + $0x688] sm:$0xff]
        %v421 = vld [vmem:[#allocation2 + $0x690] sm:$0xff]
        %v422 = vld [vmem:[#allocation2 + $0x698] sm:$0xff]
        %v423 = vld [vmem:[#allocation2 + $0x6a0] sm:$0xff]
        %v424 = vld [vmem:[#allocation2 + $0x6a8] sm:$0xff]
        %v425 = vld [vmem:[#allocation2 + $0x6b0] sm:$0xff]
        %v426 = vld [vmem:[#allocation2 + $0x6b8] sm:$0xff]
        %v427 = vld [vmem:[#allocation2 + $0x6c0] sm:$0xff]
        %v428 = vld [vmem:[#allocation2 + $0x6c8] sm:$0xff]
        %v429 = vld [vmem:[#allocation2 + $0x6d0] sm:$0xff]
        %v430 = vld [vmem:[#allocation2 + $0x6d8] sm:$0xff]
        %v431 = vld [vmem:[#allocation2 + $0x6e0] sm:$0xff]
        %v432 = vld [vmem:[#allocation2 + $0x6e8] sm:$0xff]
        %v433 = vld [vmem:[#allocation2 + $0x6f0] sm:$0xff]
        %v434 = vld [vmem:[#allocation2 + $0x6f8] sm:$0xff]
        %v435 = vld [vmem:[#allocation2 + $0x700] sm:$0xff]
        %v436 = vld [vmem:[#allocation2 + $0x708] sm:$0xff]
        %v437 = vld [vmem:[#allocation2 + $0x710] sm:$0xff]
        %v438 = vld [vmem:[#allocation2 + $0x718] sm:$0xff]
        %v439 = vld [vmem:[#allocation2 + $0x720] sm:$0xff]
        %v440 = vld [vmem:[#allocation2 + $0x728] sm:$0xff]
        %v441 = vld [vmem:[#allocation2 + $0x730] sm:$0xff]
        %v442 = vld [vmem:[#allocation2 + $0x738] sm:$0xff]
        %v443 = vld [vmem:[#allocation2 + $0x740] sm:$0xff]
        %v444 = vld [vmem:[#allocation2 + $0x748] sm:$0xff]
        %v445 = vld [vmem:[#allocation2 + $0x750] sm:$0xff]
        %v446 = vld [vmem:[#allocation2 + $0x758] sm:$0xff]
        %v447 = vld [vmem:[#allocation2 + $0x760] sm:$0xff]
        %v448 = vld [vmem:[#allocation2 + $0x768] sm:$0xff]
        %v449 = vld [vmem:[#allocation2 + $0x770] sm:$0xff]
        %v450 = vld [vmem:[#allocation2 + $0x778] sm:$0xff]
        %v451 = vld [vmem:[#allocation2 + $0x780] sm:$0xff]
        %v452 = vld [vmem:[#allocation2 + $0x788] sm:$0xff]
        %v453 = vld [vmem:[#allocation2 + $0x790] sm:$0xff]
        %v454 = vld [vmem:[#allocation2 + $0x798] sm:$0xff]
        %v455 = vld [vmem:[#allocation2 + $0x7a0] sm:$0xff]
        %v456 = vld [vmem:[#allocation2 + $0x7a8] sm:$0xff]
        %v457 = vld [vmem:[#allocation2 + $0x7b0] sm:$0xff]
        %v458 = vld [vmem:[#allocation2 + $0x7b8] sm:$0xff]
        %v459 = vld [vmem:[#allocation2 + $0x7c0] sm:$0xff]
        %v460 = vld [vmem:[#allocation2 + $0x7c8] sm:$0xff]
        %v461 = vld [vmem:[#allocation2 + $0x7d0] sm:$0xff]
        %v462 = vld [vmem:[#allocation2 + $0x7d8] sm:$0xff]
        %v463 = vld [vmem:[#allocation2 + $0x7e0] sm:$0xff]
        %v464 = vld [vmem:[#allocation2 + $0x7e8] sm:$0xff]
        %v465 = vld [vmem:[#allocation2 + $0x7f0] sm:$0xff]
        %v466 = vld [vmem:[#allocation2 + $0x7f8] sm:$0xff]
        %v467 = vld [vmem:[#allocation2 + $0x800] sm:$0xff]
        %v468 = vld [vmem:[#allocation2 + $0x808] sm:$0xff]
        %v469 = vld [vmem:[#allocation2 + $0x810] sm:$0xff]
        %v470 = vld [vmem:[#allocation2 + $0x818] sm:$0xff]
        %v471 = vld [vmem:[#allocation2 + $0x820] sm:$0xff]
        %v472 = vld [vmem:[#allocation2 + $0x828] sm:$0xff]
        %v473 = vld [vmem:[#allocation2 + $0x830] sm:$0xff]
        %v474 = vld [vmem:[#allocation2 + $0x838] sm:$0xff]
        %v475 = vld [vmem:[#allocation2 + $0x840] sm:$0xff]
        %v476 = vld [vmem:[#allocation2 + $0x848] sm:$0xff]
        %v477 = vld [vmem:[#allocation2 + $0x850] sm:$0xff]
        %v478 = vld [vmem:[#allocation2 + $0x858] sm:$0xff]
        %v479 = vld [vmem:[#allocation2 + $0x860] sm:$0xff]
        %v480 = vld [vmem:[#allocation2 + $0x868] sm:$0xff]
        %v481 = vld [vmem:[#allocation2 + $0x870] sm:$0xff]
        %v482 = vld [vmem:[#allocation2 + $0x878] sm:$0xff]
        %v483 = vld [vmem:[#allocation2 + $0x880] sm:$0xff]
        %v484 = vld [vmem:[#allocation2 + $0x888] sm:$0xff]
        %v485 = vld [vmem:[#allocation2 + $0x890] sm:$0xff]
        %v486 = vld [vmem:[#allocation2 + $0x898] sm:$0xff]
        %v487 = vld [vmem:[#allocation2 + $0x8a0] sm:$0xff]
        %v488 = vld [vmem:[#allocation2 + $0x8a8] sm:$0xff]
        %v489 = vld [vmem:[#allocation2 + $0x8b0] sm:$0xff]
        %v490 = vld [vmem:[#allocation2 + $0x8b8] sm:$0xff]
        %v491 = vld [vmem:[#allocation2 + $0x8c0] sm:$0xff]
        %v492 = vld [vmem:[#allocation2 + $0x8c8] sm:$0xff]
        %v493 = vld [vmem:[#allocation2 + $0x8d0] sm:$0xff]
        %v494 = vld [vmem:[#allocation2 + $0x8d8] sm:$0xff]
        %v495 = vld [vmem:[#allocation2 + $0x8e0] sm:$0xff]
        %v496 = vld [vmem:[#allocation2 + $0x8e8] sm:$0xff]
        %v497 = vld [vmem:[#allocation2 + $0x8f0] sm:$0xff]
        %v498 = vld [vmem:[#allocation2 + $0x8f8] sm:$0xff]
        %v499 = vld [vmem:[#allocation2 + $0x900] sm:$0xff]
        %v500 = vld [vmem:[#allocation2 + $0x908] sm:$0xff]
        %v501 = vld [vmem:[#allocation2 + $0x910] sm:$0xff]
        %v502 = vld [vmem:[#allocation2 + $0x918] sm:$0xff]
        %v503 = vld [vmem:[#allocation2 + $0x920] sm:$0xff]
        %v504 = vld [vmem:[#allocation2 + $0x928] sm:$0xff]
        %v505 = vld [vmem:[#allocation2 + $0x930] sm:$0xff]
        %v506 = vld [vmem:[#allocation2 + $0x938] sm:$0xff]
        %v507 = vld [vmem:[#allocation2 + $0x940] sm:$0xff]
        %v508 = vld [vmem:[#allocation2 + $0x948] sm:$0xff]
        %v509 = vld [vmem:[#allocation2 + $0x950] sm:$0xff]
        %v510 = vld [vmem:[#allocation2 + $0x958] sm:$0xff]
        %v511 = vld [vmem:[#allocation2 + $0x960] sm:$0xff]
        %v512 = vld [vmem:[#allocation2 + $0x968] sm:$0xff]
        %v513 = vld [vmem:[#allocation2 + $0x970] sm:$0xff]
        %v514 = vld [vmem:[#allocation2 + $0x978] sm:$0xff]
        %v515 = vld [vmem:[#allocation2 + $0x980] sm:$0xff]
        %v516 = vld [vmem:[#allocation2 + $0x988] sm:$0xff]
        %v517 = vld [vmem:[#allocation2 + $0x990] sm:$0xff]
        %v518 = vld [vmem:[#allocation2 + $0x998] sm:$0xff]
        %v519 = vld [vmem:[#allocation2 + $0x9a0] sm:$0xff]
        %v520 = vld [vmem:[#allocation2 + $0x9a8] sm:$0xff]
        %v521 = vld [vmem:[#allocation2 + $0x9b0] sm:$0xff]
        %v522 = vld [vmem:[#allocation2 + $0x9b8] sm:$0xff]
        %v523 = vld [vmem:[#allocation2 + $0x9c0] sm:$0xff]
        %v524 = vld [vmem:[#allocation2 + $0x9c8] sm:$0xff]
        %v525 = vld [vmem:[#allocation2 + $0x9d0] sm:$0xff]
        %v526 = vld [vmem:[#allocation2 + $0x9d8] sm:$0xff]
        %v527 = vld [vmem:[#allocation2 + $0x9e0] sm:$0xff]
        %v528 = vld [vmem:[#allocation2 + $0x9e8] sm:$0xff]
        %v529 = vld [vmem:[#allocation2 + $0x9f0] sm:$0xff]
        %v530 = vld [vmem:[#allocation2 + $0x9f8] sm:$0xff]
        %v531 = vld [vmem:[#allocation2 + $0xa00] sm:$0xff]
        %v532 = vld [vmem:[#allocation2 + $0xa08] sm:$0xff]
        %v533 = vld [vmem:[#allocation2 + $0xa10] sm:$0xff]
        %v534 = vld [vmem:[#allocation2 + $0xa18] sm:$0xff]
        %v535 = vld [vmem:[#allocation4] sm:$0xff]
        %v536 = vld [vmem:[#allocation4 + $0x8] sm:$0xff]
        %v537 = vld [vmem:[#allocation4 + $0x10] sm:$0x3]
        %v541 = vlaneseq
        %v542 = vshrl.u32 %v541, 7
        %v543 = vsub.s32 0, %v542
        %v544 = vrot.slane %v535, %v543
        %v545 = vlaneseq
        %v546 = vshrl.u32 %v545, 7
        %v547 = vsub.s32 1, %v546
        %v548 = vrot.slane %v535, %v547
        %v549 = vlaneseq
        %v550 = vshrl.u32 %v549, 7
        %v551 = vsub.s32 2, %v550
        %v552 = vrot.slane %v535, %v551
        %v553 = vlaneseq
        %v554 = vshrl.u32 %v553, 7
        %v555 = vsub.s32 3, %v554
        %v556 = vrot.slane %v535, %v555
        %v557 = vlaneseq
        %v558 = vshrl.u32 %v557, 7
        %v559 = vsub.s32 4, %v558
        %v560 = vrot.slane %v535, %v559
        %v561 = vlaneseq
        %v562 = vshrl.u32 %v561, 7
        %v563 = vsub.s32 5, %v562
        %v564 = vrot.slane %v535, %v563
        %v565 = vlaneseq
        %v566 = vshrl.u32 %v565, 7
        %v567 = vsub.s32 6, %v566
        %v568 = vrot.slane %v535, %v567
        %v569 = vlaneseq
        %v570 = vshrl.u32 %v569, 7
        %v571 = vsub.s32 7, %v570
        %v572 = vrot.slane %v535, %v571
        %v573 = vlaneseq
        %v574 = vshrl.u32 %v573, 7
        %v575 = vsub.s32 0, %v574
        %v576 = vrot.slane %v536, %v575
        %v577 = vlaneseq
        %v578 = vshrl.u32 %v577, 7
        %v579 = vsub.s32 1, %v578
        %v580 = vrot.slane %v536, %v579
        %v581 = vlaneseq
        %v582 = vshrl.u32 %v581, 7
        %v583 = vsub.s32 2, %v582
        %v584 = vrot.slane %v536, %v583
        %v585 = vlaneseq
        %v586 = vshrl.u32 %v585, 7
        %v587 = vsub.s32 3, %v586
        %v588 = vrot.slane %v536, %v587
        %v589 = vlaneseq
        %v590 = vshrl.u32 %v589, 7
        %v591 = vsub.s32 4, %v590
        %v592 = vrot.slane %v536, %v591
        %v593 = vlaneseq
        %v594 = vshrl.u32 %v593, 7
        %v595 = vsub.s32 5, %v594
        %v596 = vrot.slane %v536, %v595
        %v597 = vlaneseq
        %v598 = vshrl.u32 %v597, 7
        %v599 = vsub.s32 6, %v598
        %v600 = vrot.slane %v536, %v599
        %v601 = vlaneseq
        %v602 = vshrl.u32 %v601, 7
        %v603 = vsub.s32 7, %v602
        %v604 = vrot.slane %v536, %v603
        %v605 = vlaneseq
        %v606 = vshrl.u32 %v605, 7
        %v607 = vsub.s32 0, %v606
        %v608 = vrot.slane %v537, %v607
        %v609 = vlaneseq
        %v610 = vshrl.u32 %v609, 7
        %v611 = vsub.s32 1, %v610
        %v612 = vrot.slane %v537, %v611
        %vm631 = vcmask 130048
        %v633 = vsel %vm631, %v206, 0
        %v636 = vsel %vm631, %v208, 0
        %v639 = vsel %vm631, %v210, 0
        %641 = vmatprep.subr.mxu0 %v482
        %642 = vmatpush1.msra.mxu0 %v481
        %643 = vmatprep.subr.mxu0 %v464
        %644 = vmatpush1.msra.mxu0 %v463
        %645 = vmatprep.subr.mxu0 %v446
        %646 = vmatpush1.msra.mxu0 %v445
        %647 = vmatprep.subr.mxu0 %v428
        %648 = vmatpush1.msra.mxu0 %v427
        %649 = vmatprep.subr.mxu0 %v410
        %650 = vmatpush1.msra.mxu0 %v409
        %651 = vmatprep.subr.mxu0 %v392
        %652 = vmatpush1.msra.mxu0 %v391
        %653 = vmatprep.subr.mxu0 %v374
        %654 = vmatpush1.msra.mxu0 %v373
        %655 = vmatprep.subr.mxu0 %v356
        %656 = vmatpush1.msra.mxu0 %v355
        %657 = vmatprep.subr.mxu0 %v338
        %658 = vmatpush1.msra.mxu0 %v337
        %659 = vmatprep.subr.mxu0 %v320
        %660 = vmatpush1.msra.mxu0 %v319
        %661 = vmatprep.subr.mxu0 %v302
        %662 = vmatpush1.msra.mxu0 %v301
        %663 = vmatprep.subr.mxu0 %v284
        %664 = vmatpush1.msra.mxu0 %v283
        %665 = vmatprep.subr.mxu0 %v266
        %666 = vmatpush1.msra.mxu0 %v265
        %667 = vmatprep.subr.mxu0 %v248
        %668 = vmatpush1.msra.mxu0 %v247
        %669 = vmatprep.subr.mxu0 %v230
        %670 = vmatpush1.msra.mxu0 %v229
        %671 = vmatprep.subr.mxu0 %v212
        %672 = vmatpush1.msra.mxu0 %v211
        %673 = vmatprep.subr.mxu0 0.0
        %674 = vmatpush2.msra.mxu0 0.0
        %675 = vmatprep.subr.mxu0 0.0
        %676 = vmatpush2.msra.mxu0 0.0
        %677 = vmatprep.subr.mxu0 0.0
        %678 = vmatpush2.msra.mxu0 0.0
        %679 = vmatprep.subr.mxu0 0.0
        %680 = vmatpush2.msra.mxu0 0.0
        %681 = vmatprep.subr.mxu0 0.0
        %682 = vmatpush2.msra.mxu0 0.0
        %683 = vmatprep.subr.mxu0 0.0
        %684 = vmatpush2.msra.mxu0 0.0
        %685 = vmatprep.subr.mxu0 0.0
        %686 = vmatpush2.msra.mxu0 0.0
        %687 = vmatprep.subr.mxu0 0.0
        %688 = vmatpush2.msra.mxu0 0.0
        %689 = vmatprep.subr.mxu0 0.0
        %690 = vmatpush2.msra.mxu0 0.0
        %691 = vmatprep.subr.mxu0 0.0
        %692 = vmatpush2.msra.mxu0 0.0
        %693 = vmatprep.subr.mxu0 0.0
        %694 = vmatpush2.msra.mxu0 0.0
        %695 = vmatprep.subr.mxu0 0.0
        %696 = vmatpush2.msra.mxu0 0.0
        %697 = vmatprep.subr.mxu0 0.0
        %698 = vmatpush2.msra.mxu0 0.0
        %699 = vmatprep.subr.mxu0 0.0
        %700 = vmatpush2.msra.mxu0 0.0
        %701 = vmatprep.subr.mxu0 %v518
        %702 = vmatpush2.msra.mxu0 %v517
        %703 = vmatprep.subr.mxu0 %v500
        %704 = vmatpush2.msra.mxu0 %v499
        %705 = vmatprep.mubr.f32.mxu0 %v633
        %706 = vmatmul.mubr.f32.gmra.mxu0 %v205
        %v707 = vpop.f32.mrf.mxu0
        %v708 = vadd.f32 %v544, %v707
        %v709 = vpop.f32.mrf.mxu0
        %v710 = vadd.f32 %v548, %v709
        %711 = vmatprep.mubr.f32.mxu0 %v636
        %712 = vmatmul.mubr.f32.gmra.mxu0 %v207
        %v713 = vpop.f32.mrf.mxu0
        %v714 = vadd.f32 %v544, %v713
        %v715 = vpop.f32.mrf.mxu0
        %v716 = vadd.f32 %v548, %v715
        %717 = vmatprep.mubr.f32.mxu0 %v639
        %718 = vmatmul.mubr.f32.gmra.mxu0 %v209
        %v719 = vpop.f32.mrf.mxu0
        %v720 = vadd.f32 %v544, %v719
        %v721 = vpop.f32.mrf.mxu0
        %v722 = vadd.f32 %v548, %v721
        %723 = vdwg.mxu0
        %724 = vmatprep.subr.mxu0 %v484
        %725 = vmatpush1.msra.mxu0 %v483
        %726 = vmatprep.subr.mxu0 %v466
        %727 = vmatpush1.msra.mxu0 %v465
        %728 = vmatprep.subr.mxu0 %v448
        %729 = vmatpush1.msra.mxu0 %v447
        %730 = vmatprep.subr.mxu0 %v430
        %731 = vmatpush1.msra.mxu0 %v429
        %732 = vmatprep.subr.mxu0 %v412
        %733 = vmatpush1.msra.mxu0 %v411
        %734 = vmatprep.subr.mxu0 %v394
        %735 = vmatpush1.msra.mxu0 %v393
        %736 = vmatprep.subr.mxu0 %v376
        %737 = vmatpush1.msra.mxu0 %v375
        %738 = vmatprep.subr.mxu0 %v358
        %739 = vmatpush1.msra.mxu0 %v357
        %740 = vmatprep.subr.mxu0 %v340
        %741 = vmatpush1.msra.mxu0 %v339
        %742 = vmatprep.subr.mxu0 %v322
        %743 = vmatpush1.msra.mxu0 %v321
        %744 = vmatprep.subr.mxu0 %v304
        %745 = vmatpush1.msra.mxu0 %v303
        %746 = vmatprep.subr.mxu0 %v286
        %747 = vmatpush1.msra.mxu0 %v285
        %748 = vmatprep.subr.mxu0 %v268
        %749 = vmatpush1.msra.mxu0 %v267
        %750 = vmatprep.subr.mxu0 %v250
        %751 = vmatpush1.msra.mxu0 %v249
        %752 = vmatprep.subr.mxu0 %v232
        %753 = vmatpush1.msra.mxu0 %v231
        %754 = vmatprep.subr.mxu0 %v214
        %755 = vmatpush1.msra.mxu0 %v213
        %756 = vmatprep.subr.mxu0 0.0
        %757 = vmatpush2.msra.mxu0 0.0
        %758 = vmatprep.subr.mxu0 0.0
        %759 = vmatpush2.msra.mxu0 0.0
        %760 = vmatprep.subr.mxu0 0.0
        %761 = vmatpush2.msra.mxu0 0.0
        %762 = vmatprep.subr.mxu0 0.0
        %763 = vmatpush2.msra.mxu0 0.0
        %764 = vmatprep.subr.mxu0 0.0
        %765 = vmatpush2.msra.mxu0 0.0
        %766 = vmatprep.subr.mxu0 0.0
        %767 = vmatpush2.msra.mxu0 0.0
        %768 = vmatprep.subr.mxu0 0.0
        %769 = vmatpush2.msra.mxu0 0.0
        %770 = vmatprep.subr.mxu0 0.0
        %771 = vmatpush2.msra.mxu0 0.0
        %772 = vmatprep.subr.mxu0 0.0
        %773 = vmatpush2.msra.mxu0 0.0
        %774 = vmatprep.subr.mxu0 0.0
        %775 = vmatpush2.msra.mxu0 0.0
        %776 = vmatprep.subr.mxu0 0.0
        %777 = vmatpush2.msra.mxu0 0.0
        %778 = vmatprep.subr.mxu0 0.0
        %779 = vmatpush2.msra.mxu0 0.0
        %780 = vmatprep.subr.mxu0 0.0
        %781 = vmatpush2.msra.mxu0 0.0
        %782 = vmatprep.subr.mxu0 0.0
        %783 = vmatpush2.msra.mxu0 0.0
        %784 = vmatprep.subr.mxu0 %v520
        %785 = vmatpush2.msra.mxu0 %v519
        %786 = vmatprep.subr.mxu0 %v502
        %787 = vmatpush2.msra.mxu0 %v501
        %788 = vmatprep.mubr.f32.mxu0 %v633
        %789 = vmatmul.mubr.f32.gmra.mxu0 %v205
        %v790 = vpop.f32.mrf.mxu0
        %v791 = vadd.f32 %v552, %v790
        %v792 = vpop.f32.mrf.mxu0
        %v793 = vadd.f32 %v556, %v792
        %794 = vmatprep.mubr.f32.mxu0 %v636
        %795 = vmatmul.mubr.f32.gmra.mxu0 %v207
        %v796 = vpop.f32.mrf.mxu0
        %v797 = vadd.f32 %v552, %v796
        %v798 = vpop.f32.mrf.mxu0
        %v799 = vadd.f32 %v556, %v798
        %800 = vmatprep.mubr.f32.mxu0 %v639
        %801 = vmatmul.mubr.f32.gmra.mxu0 %v209
        %v802 = vpop.f32.mrf.mxu0
        %v803 = vadd.f32 %v552, %v802
        %v804 = vpop.f32.mrf.mxu0
        %v805 = vadd.f32 %v556, %v804
        %806 = vdwg.mxu0
        %807 = vmatprep.subr.mxu0 %v486
        %808 = vmatpush1.msra.mxu0 %v485
        %809 = vmatprep.subr.mxu0 %v468
        %810 = vmatpush1.msra.mxu0 %v467
        %811 = vmatprep.subr.mxu0 %v450
        %812 = vmatpush1.msra.mxu0 %v449
        %813 = vmatprep.subr.mxu0 %v432
        %814 = vmatpush1.msra.mxu0 %v431
        %815 = vmatprep.subr.mxu0 %v414
        %816 = vmatpush1.msra.mxu0 %v413
        %817 = vmatprep.subr.mxu0 %v396
        %818 = vmatpush1.msra.mxu0 %v395
        %819 = vmatprep.subr.mxu0 %v378
        %820 = vmatpush1.msra.mxu0 %v377
        %821 = vmatprep.subr.mxu0 %v360
        %822 = vmatpush1.msra.mxu0 %v359
        %823 = vmatprep.subr.mxu0 %v342
        %824 = vmatpush1.msra.mxu0 %v341
        %825 = vmatprep.subr.mxu0 %v324
        %826 = vmatpush1.msra.mxu0 %v323
        %827 = vmatprep.subr.mxu0 %v306
        %828 = vmatpush1.msra.mxu0 %v305
        %829 = vmatprep.subr.mxu0 %v288
        %830 = vmatpush1.msra.mxu0 %v287
        %831 = vmatprep.subr.mxu0 %v270
        %832 = vmatpush1.msra.mxu0 %v269
        %833 = vmatprep.subr.mxu0 %v252
        %834 = vmatpush1.msra.mxu0 %v251
        %835 = vmatprep.subr.mxu0 %v234
        %836 = vmatpush1.msra.mxu0 %v233
        %837 = vmatprep.subr.mxu0 %v216
        %838 = vmatpush1.msra.mxu0 %v215
        %839 = vmatprep.subr.mxu0 0.0
        %840 = vmatpush2.msra.mxu0 0.0
        %841 = vmatprep.subr.mxu0 0.0
        %842 = vmatpush2.msra.mxu0 0.0
        %843 = vmatprep.subr.mxu0 0.0
        %844 = vmatpush2.msra.mxu0 0.0
        %845 = vmatprep.subr.mxu0 0.0
        %846 = vmatpush2.msra.mxu0 0.0
        %847 = vmatprep.subr.mxu0 0.0
        %848 = vmatpush2.msra.mxu0 0.0
        %849 = vmatprep.subr.mxu0 0.0
        %850 = vmatpush2.msra.mxu0 0.0
        %851 = vmatprep.subr.mxu0 0.0
        %852 = vmatpush2.msra.mxu0 0.0
        %853 = vmatprep.subr.mxu0 0.0
        %854 = vmatpush2.msra.mxu0 0.0
        %855 = vmatprep.subr.mxu0 0.0
        %856 = vmatpush2.msra.mxu0 0.0
        %857 = vmatprep.subr.mxu0 0.0
        %858 = vmatpush2.msra.mxu0 0.0
        %859 = vmatprep.subr.mxu0 0.0
        %860 = vmatpush2.msra.mxu0 0.0
        %861 = vmatprep.subr.mxu0 0.0
        %862 = vmatpush2.msra.mxu0 0.0
        %863 = vmatprep.subr.mxu0 0.0
        %864 = vmatpush2.msra.mxu0 0.0
        %865 = vmatprep.subr.mxu0 0.0
        %866 = vmatpush2.msra.mxu0 0.0
        %867 = vmatprep.subr.mxu0 %v522
        %868 = vmatpush2.msra.mxu0 %v521
        %869 = vmatprep.subr.mxu0 %v504
        %870 = vmatpush2.msra.mxu0 %v503
        %871 = vmatprep.mubr.f32.mxu0 %v633
        %872 = vmatmul.mubr.f32.gmra.mxu0 %v205
        %v873 = vpop.f32.mrf.mxu0
        %v874 = vadd.f32 %v560, %v873
        %v875 = vpop.f32.mrf.mxu0
        %v876 = vadd.f32 %v564, %v875
        %877 = vmatprep.mubr.f32.mxu0 %v636
        %878 = vmatmul.mubr.f32.gmra.mxu0 %v207
        %v879 = vpop.f32.mrf.mxu0
        %v880 = vadd.f32 %v560, %v879
        %v881 = vpop.f32.mrf.mxu0
        %v882 = vadd.f32 %v564, %v881
        %883 = vmatprep.mubr.f32.mxu0 %v639
        %884 = vmatmul.mubr.f32.gmra.mxu0 %v209
        %v885 = vpop.f32.mrf.mxu0
        %v886 = vadd.f32 %v560, %v885
        %v887 = vpop.f32.mrf.mxu0
        %v888 = vadd.f32 %v564, %v887
        %889 = vdwg.mxu0
        %890 = vmatprep.subr.mxu0 %v488
        %891 = vmatpush1.msra.mxu0 %v487
        %892 = vmatprep.subr.mxu0 %v470
        %893 = vmatpush1.msra.mxu0 %v469
        %894 = vmatprep.subr.mxu0 %v452
        %895 = vmatpush1.msra.mxu0 %v451
        %896 = vmatprep.subr.mxu0 %v434
        %897 = vmatpush1.msra.mxu0 %v433
        %898 = vmatprep.subr.mxu0 %v416
        %899 = vmatpush1.msra.mxu0 %v415
        %900 = vmatprep.subr.mxu0 %v398
        %901 = vmatpush1.msra.mxu0 %v397
        %902 = vmatprep.subr.mxu0 %v380
        %903 = vmatpush1.msra.mxu0 %v379
        %904 = vmatprep.subr.mxu0 %v362
        %905 = vmatpush1.msra.mxu0 %v361
        %906 = vmatprep.subr.mxu0 %v344
        %907 = vmatpush1.msra.mxu0 %v343
        %908 = vmatprep.subr.mxu0 %v326
        %909 = vmatpush1.msra.mxu0 %v325
        %910 = vmatprep.subr.mxu0 %v308
        %911 = vmatpush1.msra.mxu0 %v307
        %912 = vmatprep.subr.mxu0 %v290
        %913 = vmatpush1.msra.mxu0 %v289
        %914 = vmatprep.subr.mxu0 %v272
        %915 = vmatpush1.msra.mxu0 %v271
        %916 = vmatprep.subr.mxu0 %v254
        %917 = vmatpush1.msra.mxu0 %v253
        %918 = vmatprep.subr.mxu0 %v236
        %919 = vmatpush1.msra.mxu0 %v235
        %920 = vmatprep.subr.mxu0 %v218
        %921 = vmatpush1.msra.mxu0 %v217
        %922 = vmatprep.subr.mxu0 0.0
        %923 = vmatpush2.msra.mxu0 0.0
        %924 = vmatprep.subr.mxu0 0.0
        %925 = vmatpush2.msra.mxu0 0.0
        %926 = vmatprep.subr.mxu0 0.0
        %927 = vmatpush2.msra.mxu0 0.0
        %928 = vmatprep.subr.mxu0 0.0
        %929 = vmatpush2.msra.mxu0 0.0
        %930 = vmatprep.subr.mxu0 0.0
        %931 = vmatpush2.msra.mxu0 0.0
        %932 = vmatprep.subr.mxu0 0.0
        %933 = vmatpush2.msra.mxu0 0.0
        %934 = vmatprep.subr.mxu0 0.0
        %935 = vmatpush2.msra.mxu0 0.0
        %936 = vmatprep.subr.mxu0 0.0
        %937 = vmatpush2.msra.mxu0 0.0
        %938 = vmatprep.subr.mxu0 0.0
        %939 = vmatpush2.msra.mxu0 0.0
        %940 = vmatprep.subr.mxu0 0.0
        %941 = vmatpush2.msra.mxu0 0.0
        %942 = vmatprep.subr.mxu0 0.0
        %943 = vmatpush2.msra.mxu0 0.0
        %944 = vmatprep.subr.mxu0 0.0
        %945 = vmatpush2.msra.mxu0 0.0
        %946 = vmatprep.subr.mxu0 0.0
        %947 = vmatpush2.msra.mxu0 0.0
        %948 = vmatprep.subr.mxu0 0.0
        %949 = vmatpush2.msra.mxu0 0.0
        %950 = vmatprep.subr.mxu0 %v524
        %951 = vmatpush2.msra.mxu0 %v523
        %952 = vmatprep.subr.mxu0 %v506
        %953 = vmatpush2.msra.mxu0 %v505
        %954 = vmatprep.mubr.f32.mxu0 %v633
        %955 = vmatmul.mubr.f32.gmra.mxu0 %v205
        %v956 = vpop.f32.mrf.mxu0
        %v957 = vadd.f32 %v568, %v956
        %v958 = vpop.f32.mrf.mxu0
        %v959 = vadd.f32 %v572, %v958
        %960 = vmatprep.mubr.f32.mxu0 %v636
        %961 = vmatmul.mubr.f32.gmra.mxu0 %v207
        %v962 = vpop.f32.mrf.mxu0
        %v963 = vadd.f32 %v568, %v962
        %v964 = vpop.f32.mrf.mxu0
        %v965 = vadd.f32 %v572, %v964
        %966 = vmatprep.mubr.f32.mxu0 %v639
        %967 = vmatmul.mubr.f32.gmra.mxu0 %v209
        %v968 = vpop.f32.mrf.mxu0
        %v969 = vadd.f32 %v568, %v968
        %v970 = vpop.f32.mrf.mxu0
        %v971 = vadd.f32 %v572, %v970
        %972 = vdwg.mxu0
        %973 = vmatprep.subr.mxu0 %v490
        %974 = vmatpush1.msra.mxu0 %v489
        %975 = vmatprep.subr.mxu0 %v472
        %976 = vmatpush1.msra.mxu0 %v471
        %977 = vmatprep.subr.mxu0 %v454
        %978 = vmatpush1.msra.mxu0 %v453
        %979 = vmatprep.subr.mxu0 %v436
        %980 = vmatpush1.msra.mxu0 %v435
        %981 = vmatprep.subr.mxu0 %v418
        %982 = vmatpush1.msra.mxu0 %v417
        %983 = vmatprep.subr.mxu0 %v400
        %984 = vmatpush1.msra.mxu0 %v399
        %985 = vmatprep.subr.mxu0 %v382
        %986 = vmatpush1.msra.mxu0 %v381
        %987 = vmatprep.subr.mxu0 %v364
        %988 = vmatpush1.msra.mxu0 %v363
        %989 = vmatprep.subr.mxu0 %v346
        %990 = vmatpush1.msra.mxu0 %v345
        %991 = vmatprep.subr.mxu0 %v328
        %992 = vmatpush1.msra.mxu0 %v327
        %993 = vmatprep.subr.mxu0 %v310
        %994 = vmatpush1.msra.mxu0 %v309
        %995 = vmatprep.subr.mxu0 %v292
        %996 = vmatpush1.msra.mxu0 %v291
        %997 = vmatprep.subr.mxu0 %v274
        %998 = vmatpush1.msra.mxu0 %v273
        %999 = vmatprep.subr.mxu0 %v256
        %1000 = vmatpush1.msra.mxu0 %v255
        %1001 = vmatprep.subr.mxu0 %v238
        %1002 = vmatpush1.msra.mxu0 %v237
        %1003 = vmatprep.subr.mxu0 %v220
        %1004 = vmatpush1.msra.mxu0 %v219
        %1005 = vmatprep.subr.mxu0 0.0
        %1006 = vmatpush2.msra.mxu0 0.0
        %1007 = vmatprep.subr.mxu0 0.0
        %1008 = vmatpush2.msra.mxu0 0.0
        %1009 = vmatprep.subr.mxu0 0.0
        %1010 = vmatpush2.msra.mxu0 0.0
        %1011 = vmatprep.subr.mxu0 0.0
        %1012 = vmatpush2.msra.mxu0 0.0
        %1013 = vmatprep.subr.mxu0 0.0
        %1014 = vmatpush2.msra.mxu0 0.0
        %1015 = vmatprep.subr.mxu0 0.0
        %1016 = vmatpush2.msra.mxu0 0.0
        %1017 = vmatprep.subr.mxu0 0.0
        %1018 = vmatpush2.msra.mxu0 0.0
        %1019 = vmatprep.subr.mxu0 0.0
        %1020 = vmatpush2.msra.mxu0 0.0
        %1021 = vmatprep.subr.mxu0 0.0
        %1022 = vmatpush2.msra.mxu0 0.0
        %1023 = vmatprep.subr.mxu0 0.0
        %1024 = vmatpush2.msra.mxu0 0.0
        %1025 = vmatprep.subr.mxu0 0.0
        %1026 = vmatpush2.msra.mxu0 0.0
        %1027 = vmatprep.subr.mxu0 0.0
        %1028 = vmatpush2.msra.mxu0 0.0
        %1029 = vmatprep.subr.mxu0 0.0
        %1030 = vmatpush2.msra.mxu0 0.0
        %1031 = vmatprep.subr.mxu0 0.0
        %1032 = vmatpush2.msra.mxu0 0.0
        %1033 = vmatprep.subr.mxu0 %v526
        %1034 = vmatpush2.msra.mxu0 %v525
        %1035 = vmatprep.subr.mxu0 %v508
        %1036 = vmatpush2.msra.mxu0 %v507
        %1037 = vmatprep.mubr.f32.mxu0 %v633
        %1038 = vmatmul.mubr.f32.gmra.mxu0 %v205
        %v1039 = vpop.f32.mrf.mxu0
        %v1040 = vadd.f32 %v576, %v1039
        %v1041 = vpop.f32.mrf.mxu0
        %v1042 = vadd.f32 %v580, %v1041
        %1043 = vmatprep.mubr.f32.mxu0 %v636
        %1044 = vmatmul.mubr.f32.gmra.mxu0 %v207
        %v1045 = vpop.f32.mrf.mxu0
        %v1046 = vadd.f32 %v576, %v1045
        %v1047 = vpop.f32.mrf.mxu0
        %v1048 = vadd.f32 %v580, %v1047
        %1049 = vmatprep.mubr.f32.mxu0 %v639
        %1050 = vmatmul.mubr.f32.gmra.mxu0 %v209
        %v1051 = vpop.f32.mrf.mxu0
        %v1052 = vadd.f32 %v576, %v1051
        %v1053 = vpop.f32.mrf.mxu0
        %v1054 = vadd.f32 %v580, %v1053
        %1055 = vdwg.mxu0
        %1056 = vmatprep.subr.mxu0 %v492
        %1057 = vmatpush1.msra.mxu0 %v491
        %1058 = vmatprep.subr.mxu0 %v474
        %1059 = vmatpush1.msra.mxu0 %v473
        %1060 = vmatprep.subr.mxu0 %v456
        %1061 = vmatpush1.msra.mxu0 %v455
        %1062 = vmatprep.subr.mxu0 %v438
        %1063 = vmatpush1.msra.mxu0 %v437
        %1064 = vmatprep.subr.mxu0 %v420
        %1065 = vmatpush1.msra.mxu0 %v419
        %1066 = vmatprep.subr.mxu0 %v402
        %1067 = vmatpush1.msra.mxu0 %v401
        %1068 = vmatprep.subr.mxu0 %v384
        %1069 = vmatpush1.msra.mxu0 %v383
        %1070 = vmatprep.subr.mxu0 %v366
        %1071 = vmatpush1.msra.mxu0 %v365
        %1072 = vmatprep.subr.mxu0 %v348
        %1073 = vmatpush1.msra.mxu0 %v347
        %1074 = vmatprep.subr.mxu0 %v330
        %1075 = vmatpush1.msra.mxu0 %v329
        %1076 = vmatprep.subr.mxu0 %v312
        %1077 = vmatpush1.msra.mxu0 %v311
        %1078 = vmatprep.subr.mxu0 %v294
        %1079 = vmatpush1.msra.mxu0 %v293
        %1080 = vmatprep.subr.mxu0 %v276
        %1081 = vmatpush1.msra.mxu0 %v275
        %1082 = vmatprep.subr.mxu0 %v258
        %1083 = vmatpush1.msra.mxu0 %v257
        %1084 = vmatprep.subr.mxu0 %v240
        %1085 = vmatpush1.msra.mxu0 %v239
        %1086 = vmatprep.subr.mxu0 %v222
        %1087 = vmatpush1.msra.mxu0 %v221
        %1088 = vmatprep.subr.mxu0 0.0
        %1089 = vmatpush2.msra.mxu0 0.0
        %1090 = vmatprep.subr.mxu0 0.0
        %1091 = vmatpush2.msra.mxu0 0.0
        %1092 = vmatprep.subr.mxu0 0.0
        %1093 = vmatpush2.msra.mxu0 0.0
        %1094 = vmatprep.subr.mxu0 0.0
        %1095 = vmatpush2.msra.mxu0 0.0
        %1096 = vmatprep.subr.mxu0 0.0
        %1097 = vmatpush2.msra.mxu0 0.0
        %1098 = vmatprep.subr.mxu0 0.0
        %1099 = vmatpush2.msra.mxu0 0.0
        %1100 = vmatprep.subr.mxu0 0.0
        %1101 = vmatpush2.msra.mxu0 0.0
        %1102 = vmatprep.subr.mxu0 0.0
        %1103 = vmatpush2.msra.mxu0 0.0
        %1104 = vmatprep.subr.mxu0 0.0
        %1105 = vmatpush2.msra.mxu0 0.0
        %1106 = vmatprep.subr.mxu0 0.0
        %1107 = vmatpush2.msra.mxu0 0.0
        %1108 = vmatprep.subr.mxu0 0.0
        %1109 = vmatpush2.msra.mxu0 0.0
        %1110 = vmatprep.subr.mxu0 0.0
        %1111 = vmatpush2.msra.mxu0 0.0
        %1112 = vmatprep.subr.mxu0 0.0
        %1113 = vmatpush2.msra.mxu0 0.0
        %1114 = vmatprep.subr.mxu0 0.0
        %1115 = vmatpush2.msra.mxu0 0.0
        %1116 = vmatprep.subr.mxu0 %v528
        %1117 = vmatpush2.msra.mxu0 %v527
        %1118 = vmatprep.subr.mxu0 %v510
        %1119 = vmatpush2.msra.mxu0 %v509
        %1120 = vmatprep.mubr.f32.mxu0 %v633
        %1121 = vmatmul.mubr.f32.gmra.mxu0 %v205
        %v1122 = vpop.f32.mrf.mxu0
        %v1123 = vadd.f32 %v584, %v1122
        %v1124 = vpop.f32.mrf.mxu0
        %v1125 = vadd.f32 %v588, %v1124
        %1126 = vmatprep.mubr.f32.mxu0 %v636
        %1127 = vmatmul.mubr.f32.gmra.mxu0 %v207
        %v1128 = vpop.f32.mrf.mxu0
        %v1129 = vadd.f32 %v584, %v1128
        %v1130 = vpop.f32.mrf.mxu0
        %v1131 = vadd.f32 %v588, %v1130
        %1132 = vmatprep.mubr.f32.mxu0 %v639
        %1133 = vmatmul.mubr.f32.gmra.mxu0 %v209
        %v1134 = vpop.f32.mrf.mxu0
        %v1135 = vadd.f32 %v584, %v1134
        %v1136 = vpop.f32.mrf.mxu0
        %v1137 = vadd.f32 %v588, %v1136
        %1138 = vdwg.mxu0
        %1139 = vmatprep.subr.mxu0 %v494
        %1140 = vmatpush1.msra.mxu0 %v493
        %1141 = vmatprep.subr.mxu0 %v476
        %1142 = vmatpush1.msra.mxu0 %v475
        %1143 = vmatprep.subr.mxu0 %v458
        %1144 = vmatpush1.msra.mxu0 %v457
        %1145 = vmatprep.subr.mxu0 %v440
        %1146 = vmatpush1.msra.mxu0 %v439
        %1147 = vmatprep.subr.mxu0 %v422
        %1148 = vmatpush1.msra.mxu0 %v421
        %1149 = vmatprep.subr.mxu0 %v404
        %1150 = vmatpush1.msra.mxu0 %v403
        %1151 = vmatprep.subr.mxu0 %v386
        %1152 = vmatpush1.msra.mxu0 %v385
        %1153 = vmatprep.subr.mxu0 %v368
        %1154 = vmatpush1.msra.mxu0 %v367
        %1155 = vmatprep.subr.mxu0 %v350
        %1156 = vmatpush1.msra.mxu0 %v349
        %1157 = vmatprep.subr.mxu0 %v332
        %1158 = vmatpush1.msra.mxu0 %v331
        %1159 = vmatprep.subr.mxu0 %v314
        %1160 = vmatpush1.msra.mxu0 %v313
        %1161 = vmatprep.subr.mxu0 %v296
        %1162 = vmatpush1.msra.mxu0 %v295
        %1163 = vmatprep.subr.mxu0 %v278
        %1164 = vmatpush1.msra.mxu0 %v277
        %1165 = vmatprep.subr.mxu0 %v260
        %1166 = vmatpush1.msra.mxu0 %v259
        %1167 = vmatprep.subr.mxu0 %v242
        %1168 = vmatpush1.msra.mxu0 %v241
        %1169 = vmatprep.subr.mxu0 %v224
        %1170 = vmatpush1.msra.mxu0 %v223
        %1171 = vmatprep.subr.mxu0 0.0
        %1172 = vmatpush2.msra.mxu0 0.0
        %1173 = vmatprep.subr.mxu0 0.0
        %1174 = vmatpush2.msra.mxu0 0.0
        %1175 = vmatprep.subr.mxu0 0.0
        %1176 = vmatpush2.msra.mxu0 0.0
        %1177 = vmatprep.subr.mxu0 0.0
        %1178 = vmatpush2.msra.mxu0 0.0
        %1179 = vmatprep.subr.mxu0 0.0
        %1180 = vmatpush2.msra.mxu0 0.0
        %1181 = vmatprep.subr.mxu0 0.0
        %1182 = vmatpush2.msra.mxu0 0.0
        %1183 = vmatprep.subr.mxu0 0.0
        %1184 = vmatpush2.msra.mxu0 0.0
        %1185 = vmatprep.subr.mxu0 0.0
        %1186 = vmatpush2.msra.mxu0 0.0
        %1187 = vmatprep.subr.mxu0 0.0
        %1188 = vmatpush2.msra.mxu0 0.0
        %1189 = vmatprep.subr.mxu0 0.0
        %1190 = vmatpush2.msra.mxu0 0.0
        %1191 = vmatprep.subr.mxu0 0.0
        %1192 = vmatpush2.msra.mxu0 0.0
        %1193 = vmatprep.subr.mxu0 0.0
        %1194 = vmatpush2.msra.mxu0 0.0
        %1195 = vmatprep.subr.mxu0 0.0
        %1196 = vmatpush2.msra.mxu0 0.0
        %1197 = vmatprep.subr.mxu0 0.0
        %1198 = vmatpush2.msra.mxu0 0.0
        %1199 = vmatprep.subr.mxu0 %v530
        %1200 = vmatpush2.msra.mxu0 %v529
        %1201 = vmatprep.subr.mxu0 %v512
        %1202 = vmatpush2.msra.mxu0 %v511
        %1203 = vmatprep.mubr.f32.mxu0 %v633
        %1204 = vmatmul.mubr.f32.gmra.mxu0 %v205
        %v1205 = vpop.f32.mrf.mxu0
        %v1206 = vadd.f32 %v592, %v1205
        %v1207 = vpop.f32.mrf.mxu0
        %v1208 = vadd.f32 %v596, %v1207
        %1209 = vmatprep.mubr.f32.mxu0 %v636
        %1210 = vmatmul.mubr.f32.gmra.mxu0 %v207
        %v1211 = vpop.f32.mrf.mxu0
        %v1212 = vadd.f32 %v592, %v1211
        %v1213 = vpop.f32.mrf.mxu0
        %v1214 = vadd.f32 %v596, %v1213
        %1215 = vmatprep.mubr.f32.mxu0 %v639
        %1216 = vmatmul.mubr.f32.gmra.mxu0 %v209
        %v1217 = vpop.f32.mrf.mxu0
        %v1218 = vadd.f32 %v592, %v1217
        %v1219 = vpop.f32.mrf.mxu0
        %v1220 = vadd.f32 %v596, %v1219
        %1221 = vdwg.mxu0
        %1222 = vmatprep.subr.mxu0 %v496
        %1223 = vmatpush1.msra.mxu0 %v495
        %1224 = vmatprep.subr.mxu0 %v478
        %1225 = vmatpush1.msra.mxu0 %v477
        %1226 = vmatprep.subr.mxu0 %v460
        %1227 = vmatpush1.msra.mxu0 %v459
        %1228 = vmatprep.subr.mxu0 %v442
        %1229 = vmatpush1.msra.mxu0 %v441
        %1230 = vmatprep.subr.mxu0 %v424
        %1231 = vmatpush1.msra.mxu0 %v423
        %1232 = vmatprep.subr.mxu0 %v406
        %1233 = vmatpush1.msra.mxu0 %v405
        %1234 = vmatprep.subr.mxu0 %v388
        %1235 = vmatpush1.msra.mxu0 %v387
        %1236 = vmatprep.subr.mxu0 %v370
        %1237 = vmatpush1.msra.mxu0 %v369
        %1238 = vmatprep.subr.mxu0 %v352
        %1239 = vmatpush1.msra.mxu0 %v351
        %1240 = vmatprep.subr.mxu0 %v334
        %1241 = vmatpush1.msra.mxu0 %v333
        %1242 = vmatprep.subr.mxu0 %v316
        %1243 = vmatpush1.msra.mxu0 %v315
        %1244 = vmatprep.subr.mxu0 %v298
        %1245 = vmatpush1.msra.mxu0 %v297
        %1246 = vmatprep.subr.mxu0 %v280
        %1247 = vmatpush1.msra.mxu0 %v279
        %1248 = vmatprep.subr.mxu0 %v262
        %1249 = vmatpush1.msra.mxu0 %v261
        %1250 = vmatprep.subr.mxu0 %v244
        %1251 = vmatpush1.msra.mxu0 %v243
        %1252 = vmatprep.subr.mxu0 %v226
        %1253 = vmatpush1.msra.mxu0 %v225
        %1254 = vmatprep.subr.mxu0 0.0
        %1255 = vmatpush2.msra.mxu0 0.0
        %1256 = vmatprep.subr.mxu0 0.0
        %1257 = vmatpush2.msra.mxu0 0.0
        %1258 = vmatprep.subr.mxu0 0.0
        %1259 = vmatpush2.msra.mxu0 0.0
        %1260 = vmatprep.subr.mxu0 0.0
        %1261 = vmatpush2.msra.mxu0 0.0
        %1262 = vmatprep.subr.mxu0 0.0
        %1263 = vmatpush2.msra.mxu0 0.0
        %1264 = vmatprep.subr.mxu0 0.0
        %1265 = vmatpush2.msra.mxu0 0.0
        %1266 = vmatprep.subr.mxu0 0.0
        %1267 = vmatpush2.msra.mxu0 0.0
        %1268 = vmatprep.subr.mxu0 0.0
        %1269 = vmatpush2.msra.mxu0 0.0
        %1270 = vmatprep.subr.mxu0 0.0
        %1271 = vmatpush2.msra.mxu0 0.0
        %1272 = vmatprep.subr.mxu0 0.0
        %1273 = vmatpush2.msra.mxu0 0.0
        %1274 = vmatprep.subr.mxu0 0.0
        %1275 = vmatpush2.msra.mxu0 0.0
        %1276 = vmatprep.subr.mxu0 0.0
        %1277 = vmatpush2.msra.mxu0 0.0
        %1278 = vmatprep.subr.mxu0 0.0
        %1279 = vmatpush2.msra.mxu0 0.0
        %1280 = vmatprep.subr.mxu0 0.0
        %1281 = vmatpush2.msra.mxu0 0.0
        %1282 = vmatprep.subr.mxu0 %v532
        %1283 = vmatpush2.msra.mxu0 %v531
        %1284 = vmatprep.subr.mxu0 %v514
        %1285 = vmatpush2.msra.mxu0 %v513
        %1286 = vmatprep.mubr.f32.mxu0 %v633
        %1287 = vmatmul.mubr.f32.gmra.mxu0 %v205
        %v1288 = vpop.f32.mrf.mxu0
        %v1289 = vadd.f32 %v600, %v1288
        %v1290 = vpop.f32.mrf.mxu0
        %v1291 = vadd.f32 %v604, %v1290
        %1292 = vmatprep.mubr.f32.mxu0 %v636
        %1293 = vmatmul.mubr.f32.gmra.mxu0 %v207
        %v1294 = vpop.f32.mrf.mxu0
        %v1295 = vadd.f32 %v600, %v1294
        %v1296 = vpop.f32.mrf.mxu0
        %v1297 = vadd.f32 %v604, %v1296
        %1298 = vmatprep.mubr.f32.mxu0 %v639
        %1299 = vmatmul.mubr.f32.gmra.mxu0 %v209
        %v1300 = vpop.f32.mrf.mxu0
        %v1301 = vadd.f32 %v600, %v1300
        %v1302 = vpop.f32.mrf.mxu0
        %v1303 = vadd.f32 %v604, %v1302
        %1304 = vdwg.mxu0
        %1305 = vmatprep.subr.mxu0 %v498
        %1306 = vmatpush1.msra.mxu0 %v497
        %1307 = vmatprep.subr.mxu0 %v480
        %1308 = vmatpush1.msra.mxu0 %v479
        %1309 = vmatprep.subr.mxu0 %v462
        %1310 = vmatpush1.msra.mxu0 %v461
        %1311 = vmatprep.subr.mxu0 %v444
        %1312 = vmatpush1.msra.mxu0 %v443
        %1313 = vmatprep.subr.mxu0 %v426
        %1314 = vmatpush1.msra.mxu0 %v425
        %1315 = vmatprep.subr.mxu0 %v408
        %1316 = vmatpush1.msra.mxu0 %v407
        %1317 = vmatprep.subr.mxu0 %v390
        %1318 = vmatpush1.msra.mxu0 %v389
        %1319 = vmatprep.subr.mxu0 %v372
        %1320 = vmatpush1.msra.mxu0 %v371
        %1321 = vmatprep.subr.mxu0 %v354
        %1322 = vmatpush1.msra.mxu0 %v353
        %1323 = vmatprep.subr.mxu0 %v336
        %1324 = vmatpush1.msra.mxu0 %v335
        %1325 = vmatprep.subr.mxu0 %v318
        %1326 = vmatpush1.msra.mxu0 %v317
        %1327 = vmatprep.subr.mxu0 %v300
        %1328 = vmatpush1.msra.mxu0 %v299
        %1329 = vmatprep.subr.mxu0 %v282
        %1330 = vmatpush1.msra.mxu0 %v281
        %1331 = vmatprep.subr.mxu0 %v264
        %1332 = vmatpush1.msra.mxu0 %v263
        %1333 = vmatprep.subr.mxu0 %v246
        %1334 = vmatpush1.msra.mxu0 %v245
        %1335 = vmatprep.subr.mxu0 %v228
        %1336 = vmatpush1.msra.mxu0 %v227
        %1337 = vmatprep.subr.mxu0 0.0
        %1338 = vmatpush2.msra.mxu0 0.0
        %1339 = vmatprep.subr.mxu0 0.0
        %1340 = vmatpush2.msra.mxu0 0.0
        %1341 = vmatprep.subr.mxu0 0.0
        %1342 = vmatpush2.msra.mxu0 0.0
        %1343 = vmatprep.subr.mxu0 0.0
        %1344 = vmatpush2.msra.mxu0 0.0
        %1345 = vmatprep.subr.mxu0 0.0
        %1346 = vmatpush2.msra.mxu0 0.0
        %1347 = vmatprep.subr.mxu0 0.0
        %1348 = vmatpush2.msra.mxu0 0.0
        %1349 = vmatprep.subr.mxu0 0.0
        %1350 = vmatpush2.msra.mxu0 0.0
        %1351 = vmatprep.subr.mxu0 0.0
        %1352 = vmatpush2.msra.mxu0 0.0
        %1353 = vmatprep.subr.mxu0 0.0
        %1354 = vmatpush2.msra.mxu0 0.0
        %1355 = vmatprep.subr.mxu0 0.0
        %1356 = vmatpush2.msra.mxu0 0.0
        %1357 = vmatprep.subr.mxu0 0.0
        %1358 = vmatpush2.msra.mxu0 0.0
        %1359 = vmatprep.subr.mxu0 0.0
        %1360 = vmatpush2.msra.mxu0 0.0
        %1361 = vmatprep.subr.mxu0 0.0
        %1362 = vmatpush2.msra.mxu0 0.0
        %1363 = vmatprep.subr.mxu0 0.0
        %1364 = vmatpush2.msra.mxu0 0.0
        %1365 = vmatprep.subr.mxu0 %v534
        %1366 = vmatpush2.msra.mxu0 %v533
        %1367 = vmatprep.subr.mxu0 %v516
        %1368 = vmatpush2.msra.mxu0 %v515
        %1369 = vmatprep.mubr.f32.mxu0 %v633
        %1370 = vmatmul.mubr.f32.gmra.mxu0 %v205
        %v1371 = vpop.f32.mrf.mxu0
        %v1372 = vadd.f32 %v608, %v1371
        %v1373 = vpop.f32.mrf.mxu0
        %v1374 = vadd.f32 %v612, %v1373
        %1375 = vmatprep.mubr.f32.mxu0 %v636
        %1376 = vmatmul.mubr.f32.gmra.mxu0 %v207
        %v1377 = vpop.f32.mrf.mxu0
        %v1378 = vadd.f32 %v608, %v1377
        %v1379 = vpop.f32.mrf.mxu0
        %v1380 = vadd.f32 %v612, %v1379
        %1381 = vmatprep.mubr.f32.mxu0 %v639
        %1382 = vmatmul.mubr.f32.gmra.mxu0 %v209
        %v1383 = vpop.f32.mrf.mxu0
        %v1384 = vadd.f32 %v608, %v1383
        %v1385 = vpop.f32.mrf.mxu0
        %v1386 = vadd.f32 %v612, %v1385
        %1387 = vdwg.mxu0
        %1388 = vrot.lane.b32.xlu0 %v708, 32
        %v1389 = vpop.permute.xlu0 %1388
        %1390 = vrot.lane.b32.xlu0 %v714, 32
        %v1391 = vpop.permute.xlu0 %1390
        %1392 = vrot.lane.b32.xlu0 %v720, 32
        %v1393 = vpop.permute.xlu0 %1392
        %1394 = vrot.lane.b32.xlu0 %v710, 32
        %v1395 = vpop.permute.xlu0 %1394
        %1396 = vrot.lane.b32.xlu0 %v716, 32
        %v1397 = vpop.permute.xlu0 %1396
        %1398 = vrot.lane.b32.xlu0 %v722, 32
        %v1399 = vpop.permute.xlu0 %1398
        %1400 = vrot.lane.b32.xlu0 %v791, 32
        %v1401 = vpop.permute.xlu0 %1400
        %1402 = vrot.lane.b32.xlu0 %v797, 32
        %v1403 = vpop.permute.xlu0 %1402
        %1404 = vrot.lane.b32.xlu0 %v803, 32
        %v1405 = vpop.permute.xlu0 %1404
        %1406 = vrot.lane.b32.xlu0 %v793, 32
        %v1407 = vpop.permute.xlu0 %1406
        %1408 = vrot.lane.b32.xlu0 %v799, 32
        %v1409 = vpop.permute.xlu0 %1408
        %1410 = vrot.lane.b32.xlu0 %v805, 32
        %v1411 = vpop.permute.xlu0 %1410
        %1412 = vrot.lane.b32.xlu0 %v874, 32
        %v1413 = vpop.permute.xlu0 %1412
        %1414 = vrot.lane.b32.xlu0 %v880, 32
        %v1415 = vpop.permute.xlu0 %1414
        %1416 = vrot.lane.b32.xlu0 %v886, 32
        %v1417 = vpop.permute.xlu0 %1416
        %1418 = vrot.lane.b32.xlu0 %v876, 32
        %v1419 = vpop.permute.xlu0 %1418
        %1420 = vrot.lane.b32.xlu0 %v882, 32
        %v1421 = vpop.permute.xlu0 %1420
        %1422 = vrot.lane.b32.xlu0 %v888, 32
        %v1423 = vpop.permute.xlu0 %1422
        %1424 = vrot.lane.b32.xlu0 %v957, 32
        %v1425 = vpop.permute.xlu0 %1424
        %1426 = vrot.lane.b32.xlu0 %v963, 32
        %v1427 = vpop.permute.xlu0 %1426
        %1428 = vrot.lane.b32.xlu0 %v969, 32
        %v1429 = vpop.permute.xlu0 %1428
        %1430 = vrot.lane.b32.xlu0 %v959, 32
        %v1431 = vpop.permute.xlu0 %1430
        %1432 = vrot.lane.b32.xlu0 %v965, 32
        %v1433 = vpop.permute.xlu0 %1432
        %1434 = vrot.lane.b32.xlu0 %v971, 32
        %v1435 = vpop.permute.xlu0 %1434
        %1436 = vrot.lane.b32.xlu0 %v1040, 32
        %v1437 = vpop.permute.xlu0 %1436
        %1438 = vrot.lane.b32.xlu0 %v1046, 32
        %v1439 = vpop.permute.xlu0 %1438
        %1440 = vrot.lane.b32.xlu0 %v1052, 32
        %v1441 = vpop.permute.xlu0 %1440
        %1442 = vrot.lane.b32.xlu0 %v1042, 32
        %v1443 = vpop.permute.xlu0 %1442
        %1444 = vrot.lane.b32.xlu0 %v1048, 32
        %v1445 = vpop.permute.xlu0 %1444
        %1446 = vrot.lane.b32.xlu0 %v1054, 32
        %v1447 = vpop.permute.xlu0 %1446
        %1448 = vrot.lane.b32.xlu0 %v1123, 32
        %v1449 = vpop.permute.xlu0 %1448
        %1450 = vrot.lane.b32.xlu0 %v1129, 32
        %v1451 = vpop.permute.xlu0 %1450
        %1452 = vrot.lane.b32.xlu0 %v1135, 32
        %v1453 = vpop.permute.xlu0 %1452
        %1454 = vrot.lane.b32.xlu0 %v1125, 32
        %v1455 = vpop.permute.xlu0 %1454
        %1456 = vrot.lane.b32.xlu0 %v1131, 32
        %v1457 = vpop.permute.xlu0 %1456
        %1458 = vrot.lane.b32.xlu0 %v1137, 32
        %v1459 = vpop.permute.xlu0 %1458
        %1460 = vrot.lane.b32.xlu0 %v1206, 32
        %v1461 = vpop.permute.xlu0 %1460
        %1462 = vrot.lane.b32.xlu0 %v1212, 32
        %v1463 = vpop.permute.xlu0 %1462
        %1464 = vrot.lane.b32.xlu0 %v1218, 32
        %v1465 = vpop.permute.xlu0 %1464
        %1466 = vrot.lane.b32.xlu0 %v1208, 32
        %v1467 = vpop.permute.xlu0 %1466
        %1468 = vrot.lane.b32.xlu0 %v1214, 32
        %v1469 = vpop.permute.xlu0 %1468
        %1470 = vrot.lane.b32.xlu0 %v1220, 32
        %v1471 = vpop.permute.xlu0 %1470
        %1472 = vrot.lane.b32.xlu0 %v1289, 32
        %v1473 = vpop.permute.xlu0 %1472
        %1474 = vrot.lane.b32.xlu0 %v1295, 32
        %v1475 = vpop.permute.xlu0 %1474
        %1476 = vrot.lane.b32.xlu0 %v1301, 32
        %v1477 = vpop.permute.xlu0 %1476
        %1478 = vrot.lane.b32.xlu0 %v1291, 32
        %v1479 = vpop.permute.xlu0 %1478
        %1480 = vrot.lane.b32.xlu0 %v1297, 32
        %v1481 = vpop.permute.xlu0 %1480
        %1482 = vrot.lane.b32.xlu0 %v1303, 32
        %v1483 = vpop.permute.xlu0 %1482
        %1484 = vrot.lane.b32.xlu0 %v1372, 32
        %v1485 = vpop.permute.xlu0 %1484
        %1486 = vrot.lane.b32.xlu0 %v1378, 32
        %v1487 = vpop.permute.xlu0 %1486
        %1488 = vrot.lane.b32.xlu0 %v1384, 32
        %v1489 = vpop.permute.xlu0 %1488
        %1490 = vrot.lane.b32.xlu0 %v1374, 32
        %v1491 = vpop.permute.xlu0 %1490
        %1492 = vrot.lane.b32.xlu0 %v1380, 32
        %v1493 = vpop.permute.xlu0 %1492
        %1494 = vrot.lane.b32.xlu0 %v1386, 32
        %v1495 = vpop.permute.xlu0 %1494
        %v1496 = vlaneseq
        %v1497 = vand.u32 %v1496, 127
        %vm1498 = vcmp.lt.s32.totalorder %v1497, 32
        %v1499 = vsel %vm1498, %v1485, %v1491
        %v1500 = vsel %vm1498, %v1487, %v1493
        %v1501 = vsel %vm1498, %v1489, %v1495
        %v1502 = vsel %vm1498, %v1479, %v1485
        %v1503 = vsel %vm1498, %v1481, %v1487
        %v1504 = vsel %vm1498, %v1483, %v1489
        %v1505 = vsel %vm1498, %v1473, %v1479
        %v1506 = vsel %vm1498, %v1475, %v1481
        %v1507 = vsel %vm1498, %v1477, %v1483
        %v1508 = vsel %vm1498, %v1467, %v1473
        %v1509 = vsel %vm1498, %v1469, %v1475
        %v1510 = vsel %vm1498, %v1471, %v1477
        %v1511 = vsel %vm1498, %v1461, %v1467
        %v1512 = vsel %vm1498, %v1463, %v1469
        %v1513 = vsel %vm1498, %v1465, %v1471
        %v1514 = vsel %vm1498, %v1455, %v1461
        %v1515 = vsel %vm1498, %v1457, %v1463
        %v1516 = vsel %vm1498, %v1459, %v1465
        %v1517 = vsel %vm1498, %v1449, %v1455
        %v1518 = vsel %vm1498, %v1451, %v1457
        %v1519 = vsel %vm1498, %v1453, %v1459
        %v1520 = vsel %vm1498, %v1443, %v1449
        %v1521 = vsel %vm1498, %v1445, %v1451
        %v1522 = vsel %vm1498, %v1447, %v1453
        %v1523 = vsel %vm1498, %v1437, %v1443
        %v1524 = vsel %vm1498, %v1439, %v1445
        %v1525 = vsel %vm1498, %v1441, %v1447
        %v1526 = vsel %vm1498, %v1431, %v1437
        %v1527 = vsel %vm1498, %v1433, %v1439
        %v1528 = vsel %vm1498, %v1435, %v1441
        %v1529 = vsel %vm1498, %v1425, %v1431
        %v1530 = vsel %vm1498, %v1427, %v1433
        %v1531 = vsel %vm1498, %v1429, %v1435
        %v1532 = vsel %vm1498, %v1419, %v1425
        %v1533 = vsel %vm1498, %v1421, %v1427
        %v1534 = vsel %vm1498, %v1423, %v1429
        %v1535 = vsel %vm1498, %v1413, %v1419
        %v1536 = vsel %vm1498, %v1415, %v1421
        %v1537 = vsel %vm1498, %v1417, %v1423
        %v1538 = vsel %vm1498, %v1407, %v1413
        %v1539 = vsel %vm1498, %v1409, %v1415
        %v1540 = vsel %vm1498, %v1411, %v1417
        %v1541 = vsel %vm1498, %v1401, %v1407
        %v1542 = vsel %vm1498, %v1403, %v1409
        %v1543 = vsel %vm1498, %v1405, %v1411
        %v1544 = vsel %vm1498, %v1395, %v1401
        %v1545 = vsel %vm1498, %v1397, %v1403
        %v1546 = vsel %vm1498, %v1399, %v1405
        %v1547 = vsel %vm1498, %v1389, %v1395
        %v1548 = vsel %vm1498, %v1391, %v1397
        %v1549 = vsel %vm1498, %v1393, %v1399
        %v1550 = vsel %vm1498, %v1491, %v1389
        %v1551 = vsel %vm1498, %v1493, %v1391
        %v1552 = vsel %vm1498, %v1495, %v1393
        %1553 = vrot.lane.b32.xlu0 %v708, 96
        %v1554 = vpop.permute.xlu0 %1553
        %1555 = vrot.lane.b32.xlu0 %v714, 96
        %v1556 = vpop.permute.xlu0 %1555
        %1557 = vrot.lane.b32.xlu0 %v720, 96
        %v1558 = vpop.permute.xlu0 %1557
        %1559 = vrot.lane.b32.xlu0 %v710, 96
        %v1560 = vpop.permute.xlu0 %1559
        %1561 = vrot.lane.b32.xlu0 %v716, 96
        %v1562 = vpop.permute.xlu0 %1561
        %1563 = vrot.lane.b32.xlu0 %v722, 96
        %v1564 = vpop.permute.xlu0 %1563
        %1565 = vrot.lane.b32.xlu0 %v791, 96
        %v1566 = vpop.permute.xlu0 %1565
        %1567 = vrot.lane.b32.xlu0 %v797, 96
        %v1568 = vpop.permute.xlu0 %1567
        %1569 = vrot.lane.b32.xlu0 %v803, 96
        %v1570 = vpop.permute.xlu0 %1569
        %1571 = vrot.lane.b32.xlu0 %v793, 96
        %v1572 = vpop.permute.xlu0 %1571
        %1573 = vrot.lane.b32.xlu0 %v799, 96
        %v1574 = vpop.permute.xlu0 %1573
        %1575 = vrot.lane.b32.xlu0 %v805, 96
        %v1576 = vpop.permute.xlu0 %1575
        %1577 = vrot.lane.b32.xlu0 %v874, 96
        %v1578 = vpop.permute.xlu0 %1577
        %1579 = vrot.lane.b32.xlu0 %v880, 96
        %v1580 = vpop.permute.xlu0 %1579
        %1581 = vrot.lane.b32.xlu0 %v886, 96
        %v1582 = vpop.permute.xlu0 %1581
        %1583 = vrot.lane.b32.xlu0 %v876, 96
        %v1584 = vpop.permute.xlu0 %1583
        %1585 = vrot.lane.b32.xlu0 %v882, 96
        %v1586 = vpop.permute.xlu0 %1585
        %1587 = vrot.lane.b32.xlu0 %v888, 96
        %v1588 = vpop.permute.xlu0 %1587
        %1589 = vrot.lane.b32.xlu0 %v957, 96
        %v1590 = vpop.permute.xlu0 %1589
        %1591 = vrot.lane.b32.xlu0 %v963, 96
        %v1592 = vpop.permute.xlu0 %1591
        %1593 = vrot.lane.b32.xlu0 %v969, 96
        %v1594 = vpop.permute.xlu0 %1593
        %1595 = vrot.lane.b32.xlu0 %v959, 96
        %v1596 = vpop.permute.xlu0 %1595
        %1597 = vrot.lane.b32.xlu0 %v965, 96
        %v1598 = vpop.permute.xlu0 %1597
        %1599 = vrot.lane.b32.xlu0 %v971, 96
        %v1600 = vpop.permute.xlu0 %1599
        %1601 = vrot.lane.b32.xlu0 %v1040, 96
        %v1602 = vpop.permute.xlu0 %1601
        %1603 = vrot.lane.b32.xlu0 %v1046, 96
        %v1604 = vpop.permute.xlu0 %1603
        %1605 = vrot.lane.b32.xlu0 %v1052, 96
        %v1606 = vpop.permute.xlu0 %1605
        %1607 = vrot.lane.b32.xlu0 %v1042, 96
        %v1608 = vpop.permute.xlu0 %1607
        %1609 = vrot.lane.b32.xlu0 %v1048, 96
        %v1610 = vpop.permute.xlu0 %1609
        %1611 = vrot.lane.b32.xlu0 %v1054, 96
        %v1612 = vpop.permute.xlu0 %1611
        %1613 = vrot.lane.b32.xlu0 %v1123, 96
        %v1614 = vpop.permute.xlu0 %1613
        %1615 = vrot.lane.b32.xlu0 %v1129, 96
        %v1616 = vpop.permute.xlu0 %1615
        %1617 = vrot.lane.b32.xlu0 %v1135, 96
        %v1618 = vpop.permute.xlu0 %1617
        %1619 = vrot.lane.b32.xlu0 %v1125, 96
        %v1620 = vpop.permute.xlu0 %1619
        %1621 = vrot.lane.b32.xlu0 %v1131, 96
        %v1622 = vpop.permute.xlu0 %1621
        %1623 = vrot.lane.b32.xlu0 %v1137, 96
        %v1624 = vpop.permute.xlu0 %1623
        %1625 = vrot.lane.b32.xlu0 %v1206, 96
        %v1626 = vpop.permute.xlu0 %1625
        %1627 = vrot.lane.b32.xlu0 %v1212, 96
        %v1628 = vpop.permute.xlu0 %1627
        %1629 = vrot.lane.b32.xlu0 %v1218, 96
        %v1630 = vpop.permute.xlu0 %1629
        %1631 = vrot.lane.b32.xlu0 %v1208, 96
        %v1632 = vpop.permute.xlu0 %1631
        %1633 = vrot.lane.b32.xlu0 %v1214, 96
        %v1634 = vpop.permute.xlu0 %1633
        %1635 = vrot.lane.b32.xlu0 %v1220, 96
        %v1636 = vpop.permute.xlu0 %1635
        %1637 = vrot.lane.b32.xlu0 %v1289, 96
        %v1638 = vpop.permute.xlu0 %1637
        %1639 = vrot.lane.b32.xlu0 %v1295, 96
        %v1640 = vpop.permute.xlu0 %1639
        %1641 = vrot.lane.b32.xlu0 %v1301, 96
        %v1642 = vpop.permute.xlu0 %1641
        %1643 = vrot.lane.b32.xlu0 %v1291, 96
        %v1644 = vpop.permute.xlu0 %1643
        %1645 = vrot.lane.b32.xlu0 %v1297, 96
        %v1646 = vpop.permute.xlu0 %1645
        %1647 = vrot.lane.b32.xlu0 %v1303, 96
        %v1648 = vpop.permute.xlu0 %1647
        %1649 = vrot.lane.b32.xlu0 %v1372, 96
        %v1650 = vpop.permute.xlu0 %1649
        %1651 = vrot.lane.b32.xlu0 %v1378, 96
        %v1652 = vpop.permute.xlu0 %1651
        %1653 = vrot.lane.b32.xlu0 %v1384, 96
        %v1654 = vpop.permute.xlu0 %1653
        %1655 = vrot.lane.b32.xlu0 %v1374, 96
        %v1656 = vpop.permute.xlu0 %1655
        %1657 = vrot.lane.b32.xlu0 %v1380, 96
        %v1658 = vpop.permute.xlu0 %1657
        %1659 = vrot.lane.b32.xlu0 %v1386, 96
        %v1660 = vpop.permute.xlu0 %1659
        %vm1661 = vcmp.lt.s32.totalorder %v1497, 96
        %v1662 = vsel %vm1661, %v1650, %v1656
        %v1663 = vsel %vm1661, %v1652, %v1658
        %v1664 = vsel %vm1661, %v1654, %v1660
        %v1665 = vsel %vm1661, %v1644, %v1650
        %v1666 = vsel %vm1661, %v1646, %v1652
        %v1667 = vsel %vm1661, %v1648, %v1654
        %v1668 = vsel %vm1661, %v1638, %v1644
        %v1669 = vsel %vm1661, %v1640, %v1646
        %v1670 = vsel %vm1661, %v1642, %v1648
        %v1671 = vsel %vm1661, %v1632, %v1638
        %v1672 = vsel %vm1661, %v1634, %v1640
        %v1673 = vsel %vm1661, %v1636, %v1642
        %v1674 = vsel %vm1661, %v1626, %v1632
        %v1675 = vsel %vm1661, %v1628, %v1634
        %v1676 = vsel %vm1661, %v1630, %v1636
        %v1677 = vsel %vm1661, %v1620, %v1626
        %v1678 = vsel %vm1661, %v1622, %v1628
        %v1679 = vsel %vm1661, %v1624, %v1630
        %v1680 = vsel %vm1661, %v1614, %v1620
        %v1681 = vsel %vm1661, %v1616, %v1622
        %v1682 = vsel %vm1661, %v1618, %v1624
        %v1683 = vsel %vm1661, %v1608, %v1614
        %v1684 = vsel %vm1661, %v1610, %v1616
        %v1685 = vsel %vm1661, %v1612, %v1618
        %v1686 = vsel %vm1661, %v1602, %v1608
        %v1687 = vsel %vm1661, %v1604, %v1610
        %v1688 = vsel %vm1661, %v1606, %v1612
        %v1689 = vsel %vm1661, %v1596, %v1602
        %v1690 = vsel %vm1661, %v1598, %v1604
        %v1691 = vsel %vm1661, %v1600, %v1606
        %v1692 = vsel %vm1661, %v1590, %v1596
        %v1693 = vsel %vm1661, %v1592, %v1598
        %v1694 = vsel %vm1661, %v1594, %v1600
        %v1695 = vsel %vm1661, %v1584, %v1590
        %v1696 = vsel %vm1661, %v1586, %v1592
        %v1697 = vsel %vm1661, %v1588, %v1594
        %v1698 = vsel %vm1661, %v1578, %v1584
        %v1699 = vsel %vm1661, %v1580, %v1586
        %v1700 = vsel %vm1661, %v1582, %v1588
        %v1701 = vsel %vm1661, %v1572, %v1578
        %v1702 = vsel %vm1661, %v1574, %v1580
        %v1703 = vsel %vm1661, %v1576, %v1582
        %v1704 = vsel %vm1661, %v1566, %v1572
        %v1705 = vsel %vm1661, %v1568, %v1574
        %v1706 = vsel %vm1661, %v1570, %v1576
        %v1707 = vsel %vm1661, %v1560, %v1566
        %v1708 = vsel %vm1661, %v1562, %v1568
        %v1709 = vsel %vm1661, %v1564, %v1570
        %v1710 = vsel %vm1661, %v1554, %v1560
        %v1711 = vsel %vm1661, %v1556, %v1562
        %v1712 = vsel %vm1661, %v1558, %v1564
        %v1713 = vsel %vm1661, %v1656, %v1554
        %v1714 = vsel %vm1661, %v1658, %v1556
        %v1715 = vsel %vm1661, %v1660, %v1558
        %v1716 = vmax.f32 %v1550, %v1710
        %v1717 = vmax.f32 %v1547, %v1707
        %v1718 = vmax.f32 %v1544, %v1704
        %v1719 = vmax.f32 %v1541, %v1701
        %v1720 = vmax.f32 %v1538, %v1698
        %v1721 = vmax.f32 %v1535, %v1695
        %v1722 = vmax.f32 %v1532, %v1692
        %v1723 = vmax.f32 %v1529, %v1689
        %v1724 = vmax.f32 %v1526, %v1686
        %v1725 = vmax.f32 %v1523, %v1683
        %v1726 = vmax.f32 %v1520, %v1680
        %v1727 = vmax.f32 %v1517, %v1677
        %v1728 = vmax.f32 %v1514, %v1674
        %v1729 = vmax.f32 %v1511, %v1671
        %v1730 = vmax.f32 %v1508, %v1668
        %v1731 = vmax.f32 %v1505, %v1665
        %v1732 = vmax.f32 %v1502, %v1662
        %v1733 = vmax.f32 %v1499, %v1713
        %v1734 = vmax.f32 %v1551, %v1711
        %v1735 = vmax.f32 %v1548, %v1708
        %v1736 = vmax.f32 %v1545, %v1705
        %v1737 = vmax.f32 %v1542, %v1702
        %v1738 = vmax.f32 %v1539, %v1699
        %v1739 = vmax.f32 %v1536, %v1696
        %v1740 = vmax.f32 %v1533, %v1693
        %v1741 = vmax.f32 %v1530, %v1690
        %v1742 = vmax.f32 %v1527, %v1687
        %v1743 = vmax.f32 %v1524, %v1684
        %v1744 = vmax.f32 %v1521, %v1681
        %v1745 = vmax.f32 %v1518, %v1678
        %v1746 = vmax.f32 %v1515, %v1675
        %v1747 = vmax.f32 %v1512, %v1672
        %v1748 = vmax.f32 %v1509, %v1669
        %v1749 = vmax.f32 %v1506, %v1666
        %v1750 = vmax.f32 %v1503, %v1663
        %v1751 = vmax.f32 %v1500, %v1714
        %v1752 = vmax.f32 %v1552, %v1712
        %v1753 = vmax.f32 %v1549, %v1709
        %v1754 = vmax.f32 %v1546, %v1706
        %v1755 = vmax.f32 %v1543, %v1703
        %v1756 = vmax.f32 %v1540, %v1700
        %v1757 = vmax.f32 %v1537, %v1697
        %v1758 = vmax.f32 %v1534, %v1694
        %v1759 = vmax.f32 %v1531, %v1691
        %v1760 = vmax.f32 %v1528, %v1688
        %v1761 = vmax.f32 %v1525, %v1685
        %v1762 = vmax.f32 %v1522, %v1682
        %v1763 = vmax.f32 %v1519, %v1679
        %v1764 = vmax.f32 %v1516, %v1676
        %v1765 = vmax.f32 %v1513, %v1673
        %v1766 = vmax.f32 %v1510, %v1670
        %v1767 = vmax.f32 %v1507, %v1667
        %v1768 = vmax.f32 %v1504, %v1664
        %v1769 = vmax.f32 %v1501, %v1715
        %v1770 = vmax.f32 %v708, %v1716
        %v1771 = vmax.f32 %v710, %v1717
        %v1772 = vmax.f32 %v791, %v1718
        %v1773 = vmax.f32 %v793, %v1719
        %v1774 = vmax.f32 %v874, %v1720
        %v1775 = vmax.f32 %v876, %v1721
        %v1776 = vmax.f32 %v957, %v1722
        %v1777 = vmax.f32 %v959, %v1723
        %v1778 = vmax.f32 %v1040, %v1724
        %v1779 = vmax.f32 %v1042, %v1725
        %v1780 = vmax.f32 %v1123, %v1726
        %v1781 = vmax.f32 %v1125, %v1727
        %v1782 = vmax.f32 %v1206, %v1728
        %v1783 = vmax.f32 %v1208, %v1729
        %v1784 = vmax.f32 %v1289, %v1730
        %v1785 = vmax.f32 %v1291, %v1731
        %v1786 = vmax.f32 %v1372, %v1732
        %v1787 = vmax.f32 %v1374, %v1733
        %v1788 = vmax.f32 %v714, %v1734
        %v1789 = vmax.f32 %v716, %v1735
        %v1790 = vmax.f32 %v797, %v1736
        %v1791 = vmax.f32 %v799, %v1737
        %v1792 = vmax.f32 %v880, %v1738
        %v1793 = vmax.f32 %v882, %v1739
        %v1794 = vmax.f32 %v963, %v1740
        %v1795 = vmax.f32 %v965, %v1741
        %v1796 = vmax.f32 %v1046, %v1742
        %v1797 = vmax.f32 %v1048, %v1743
        %v1798 = vmax.f32 %v1129, %v1744
        %v1799 = vmax.f32 %v1131, %v1745
        %v1800 = vmax.f32 %v1212, %v1746
        %v1801 = vmax.f32 %v1214, %v1747
        %v1802 = vmax.f32 %v1295, %v1748
        %v1803 = vmax.f32 %v1297, %v1749
        %v1804 = vmax.f32 %v1378, %v1750
        %v1805 = vmax.f32 %v1380, %v1751
        %v1806 = vmax.f32 %v720, %v1752
        %v1807 = vmax.f32 %v722, %v1753
        %v1808 = vmax.f32 %v803, %v1754
        %v1809 = vmax.f32 %v805, %v1755
        %v1810 = vmax.f32 %v886, %v1756
        %v1811 = vmax.f32 %v888, %v1757
        %v1812 = vmax.f32 %v969, %v1758
        %v1813 = vmax.f32 %v971, %v1759
        %v1814 = vmax.f32 %v1052, %v1760
        %v1815 = vmax.f32 %v1054, %v1761
        %v1816 = vmax.f32 %v1135, %v1762
        %v1817 = vmax.f32 %v1137, %v1763
        %v1818 = vmax.f32 %v1218, %v1764
        %v1819 = vmax.f32 %v1220, %v1765
        %v1820 = vmax.f32 %v1301, %v1766
        %v1821 = vmax.f32 %v1303, %v1767
        %v1822 = vmax.f32 %v1384, %v1768
        %v1823 = vmax.f32 %v1386, %v1769
        %v1824 = vlaneseq
        %v1825 = vshrl.u32 %v1824, 7
        %v1826 = vadd.s32 %v1825, 8
        %v1827 = vadd.s32 %v1825, 16
        %vm1828 = vcmp.ge.s32.totalorder %v1825, 1
        %vm1829 = vcmp.ge.s32.totalorder %v1826, 1
        %vm1830 = vcmp.ge.s32.totalorder %v1827, 1
        %vm1831 = vcmp.le.s32.totalorder %v1825, 16
        %vm1832 = vcmp.le.s32.totalorder %v1826, 16
        %vm1833 = vcmp.le.s32.totalorder %v1827, 16
        %vm1834 = vmand %vm1828, %vm1831
        %vm1835 = vmand %vm1829, %vm1832
        %vm1836 = vmand %vm1830, %vm1833
        %v1837 = vsel %vm1834, %v1779, -1e+30
        %v1838 = vsel %vm1834, %v1780, -1e+30
        %v1839 = vsel %vm1834, %v1781, -1e+30
        %v1840 = vsel %vm1834, %v1782, -1e+30
        %v1841 = vsel %vm1834, %v1783, -1e+30
        %v1842 = vsel %vm1834, %v1784, -1e+30
        %v1843 = vsel %vm1834, %v1785, -1e+30
        %v1844 = vsel %vm1834, %v1786, -1e+30
        %v1845 = vsel %vm1834, %v1787, -1e+30
        %v1846 = vsel %vm1835, %v1797, -1e+30
        %v1847 = vsel %vm1835, %v1798, -1e+30
        %v1848 = vsel %vm1835, %v1799, -1e+30
        %v1849 = vsel %vm1835, %v1800, -1e+30
        %v1850 = vsel %vm1835, %v1801, -1e+30
        %v1851 = vsel %vm1835, %v1802, -1e+30
        %v1852 = vsel %vm1835, %v1803, -1e+30
        %v1853 = vsel %vm1835, %v1804, -1e+30
        %v1854 = vsel %vm1835, %v1805, -1e+30
        %v1855 = vsel %vm1836, %v1815, -1e+30
        %v1856 = vsel %vm1836, %v1816, -1e+30
        %v1857 = vsel %vm1836, %v1817, -1e+30
        %v1858 = vsel %vm1836, %v1818, -1e+30
        %v1859 = vsel %vm1836, %v1819, -1e+30
        %v1860 = vsel %vm1836, %v1820, -1e+30
        %v1861 = vsel %vm1836, %v1821, -1e+30
        %v1862 = vsel %vm1836, %v1822, -1e+30
        %v1863 = vsel %vm1836, %v1823, -1e+30
        %vm1891 = vcmask 1046528
        %v1892 = vrot.slane %v1837, 1
        %v1893 = vrot.slane %v1846, 1
        %v1894 = vsel %vm1891, %v1892, %v1893
        %v1895 = vrot.slane %v1838, 1
        %v1896 = vrot.slane %v1847, 1
        %v1897 = vsel %vm1891, %v1895, %v1896
        %v1898 = vrot.slane %v1839, 1
        %v1899 = vrot.slane %v1848, 1
        %v1900 = vsel %vm1891, %v1898, %v1899
        %v1901 = vrot.slane %v1840, 1
        %v1902 = vrot.slane %v1849, 1
        %v1903 = vsel %vm1891, %v1901, %v1902
        %v1904 = vrot.slane %v1841, 1
        %v1905 = vrot.slane %v1850, 1
        %v1906 = vsel %vm1891, %v1904, %v1905
        %v1907 = vrot.slane %v1842, 1
        %v1908 = vrot.slane %v1851, 1
        %v1909 = vsel %vm1891, %v1907, %v1908
        %v1910 = vrot.slane %v1843, 1
        %v1911 = vrot.slane %v1852, 1
        %v1912 = vsel %vm1891, %v1910, %v1911
        %v1913 = vrot.slane %v1844, 1
        %v1914 = vrot.slane %v1853, 1
        %v1915 = vsel %vm1891, %v1913, %v1914
        %v1916 = vrot.slane %v1845, 1
        %v1917 = vrot.slane %v1854, 1
        %v1918 = vsel %vm1891, %v1916, %v1917
        %v1919 = vrot.slane %v1855, 1
        %v1920 = vsel %vm1891, %v1893, %v1919
        %v1921 = vrot.slane %v1856, 1
        %v1922 = vsel %vm1891, %v1896, %v1921
        %v1923 = vrot.slane %v1857, 1
        %v1924 = vsel %vm1891, %v1899, %v1923
        %v1925 = vrot.slane %v1858, 1
        %v1926 = vsel %vm1891, %v1902, %v1925
        %v1927 = vrot.slane %v1859, 1
        %v1928 = vsel %vm1891, %v1905, %v1927
        %v1929 = vrot.slane %v1860, 1
        %v1930 = vsel %vm1891, %v1908, %v1929
        %v1931 = vrot.slane %v1861, 1
        %v1932 = vsel %vm1891, %v1911, %v1931
        %v1933 = vrot.slane %v1862, 1
        %v1934 = vsel %vm1891, %v1914, %v1933
        %v1935 = vrot.slane %v1863, 1
        %v1936 = vsel %vm1891, %v1917, %v1935
        %v1964 = vmax.f32 %v1837, %v1894
        %v1965 = vmax.f32 %v1838, %v1897
        %v1966 = vmax.f32 %v1839, %v1900
        %v1967 = vmax.f32 %v1840, %v1903
        %v1968 = vmax.f32 %v1841, %v1906
        %v1969 = vmax.f32 %v1842, %v1909
        %v1970 = vmax.f32 %v1843, %v1912
        %v1971 = vmax.f32 %v1844, %v1915
        %v1972 = vmax.f32 %v1845, %v1918
        %v1973 = vmax.f32 %v1846, %v1920
        %v1974 = vmax.f32 %v1847, %v1922
        %v1975 = vmax.f32 %v1848, %v1924
        %v1976 = vmax.f32 %v1849, %v1926
        %v1977 = vmax.f32 %v1850, %v1928
        %v1978 = vmax.f32 %v1851, %v1930
        %v1979 = vmax.f32 %v1852, %v1932
        %v1980 = vmax.f32 %v1853, %v1934
        %v1981 = vmax.f32 %v1854, %v1936
        %v1982 = vmax.f32 %v1855, %v1919
        %v1983 = vmax.f32 %v1856, %v1921
        %v1984 = vmax.f32 %v1857, %v1923
        %v1985 = vmax.f32 %v1858, %v1925
        %v1986 = vmax.f32 %v1859, %v1927
        %v1987 = vmax.f32 %v1860, %v1929
        %v1988 = vmax.f32 %v1861, %v1931
        %v1989 = vmax.f32 %v1862, %v1933
        %v1990 = vmax.f32 %v1863, %v1935
        %v1991 = vmax.f32 %v1770, %v1964
        %v1992 = vmax.f32 %v1771, %v1965
        %v1993 = vmax.f32 %v1772, %v1966
        %v1994 = vmax.f32 %v1773, %v1967
        %v1995 = vmax.f32 %v1774, %v1968
        %v1996 = vmax.f32 %v1775, %v1969
        %v1997 = vmax.f32 %v1776, %v1970
        %v1998 = vmax.f32 %v1777, %v1971
        %v1999 = vmax.f32 %v1778, %v1972
        %v2000 = vmax.f32 %v1788, %v1973
        %v2001 = vmax.f32 %v1789, %v1974
        %v2002 = vmax.f32 %v1790, %v1975
        %v2003 = vmax.f32 %v1791, %v1976
        %v2004 = vmax.f32 %v1792, %v1977
        %v2005 = vmax.f32 %v1793, %v1978
        %v2006 = vmax.f32 %v1794, %v1979
        %v2007 = vmax.f32 %v1795, %v1980
        %v2008 = vmax.f32 %v1796, %v1981
        %v2009 = vmax.f32 %v1806, %v1982
        %v2010 = vmax.f32 %v1807, %v1983
        %v2011 = vmax.f32 %v1808, %v1984
        %v2012 = vmax.f32 %v1809, %v1985
        %v2013 = vmax.f32 %v1810, %v1986
        %v2014 = vmax.f32 %v1811, %v1987
        %v2015 = vmax.f32 %v1812, %v1988
        %v2016 = vmax.f32 %v1813, %v1989
        %v2017 = vmax.f32 %v1814, %v1990
        %v2045 = vrot.slane %v1770, 1
        %v2046 = vrot.slane %v1788, 1
        %v2047 = vsel %vm1891, %v2045, %v2046
        %v2048 = vrot.slane %v1771, 1
        %v2049 = vrot.slane %v1789, 1
        %v2050 = vsel %vm1891, %v2048, %v2049
        %v2051 = vrot.slane %v1772, 1
        %v2052 = vrot.slane %v1790, 1
        %v2053 = vsel %vm1891, %v2051, %v2052
        %v2054 = vrot.slane %v1773, 1
        %v2055 = vrot.slane %v1791, 1
        %v2056 = vsel %vm1891, %v2054, %v2055
        %v2057 = vrot.slane %v1774, 1
        %v2058 = vrot.slane %v1792, 1
        %v2059 = vsel %vm1891, %v2057, %v2058
        %v2060 = vrot.slane %v1775, 1
        %v2061 = vrot.slane %v1793, 1
        %v2062 = vsel %vm1891, %v2060, %v2061
        %v2063 = vrot.slane %v1776, 1
        %v2064 = vrot.slane %v1794, 1
        %v2065 = vsel %vm1891, %v2063, %v2064
        %v2066 = vrot.slane %v1777, 1
        %v2067 = vrot.slane %v1795, 1
        %v2068 = vsel %vm1891, %v2066, %v2067
        %v2069 = vrot.slane %v1778, 1
        %v2070 = vrot.slane %v1796, 1
        %v2071 = vsel %vm1891, %v2069, %v2070
        %v2072 = vrot.slane %v1806, 1
        %v2073 = vsel %vm1891, %v2046, %v2072
        %v2074 = vrot.slane %v1807, 1
        %v2075 = vsel %vm1891, %v2049, %v2074
        %v2076 = vrot.slane %v1808, 1
        %v2077 = vsel %vm1891, %v2052, %v2076
        %v2078 = vrot.slane %v1809, 1
        %v2079 = vsel %vm1891, %v2055, %v2078
        %v2080 = vrot.slane %v1810, 1
        %v2081 = vsel %vm1891, %v2058, %v2080
        %v2082 = vrot.slane %v1811, 1
        %v2083 = vsel %vm1891, %v2061, %v2082
        %v2084 = vrot.slane %v1812, 1
        %v2085 = vsel %vm1891, %v2064, %v2084
        %v2086 = vrot.slane %v1813, 1
        %v2087 = vsel %vm1891, %v2067, %v2086
        %v2088 = vrot.slane %v1814, 1
        %v2089 = vsel %vm1891, %v2070, %v2088
        %v2117 = vmax.f32 %v1770, %v2047
        %v2118 = vmax.f32 %v1771, %v2050
        %v2119 = vmax.f32 %v1772, %v2053
        %v2120 = vmax.f32 %v1773, %v2056
        %v2121 = vmax.f32 %v1774, %v2059
        %v2122 = vmax.f32 %v1775, %v2062
        %v2123 = vmax.f32 %v1776, %v2065
        %v2124 = vmax.f32 %v1777, %v2068
        %v2125 = vmax.f32 %v1778, %v2071
        %v2126 = vmax.f32 %v1788, %v2073
        %v2127 = vmax.f32 %v1789, %v2075
        %v2128 = vmax.f32 %v1790, %v2077
        %v2129 = vmax.f32 %v1791, %v2079
        %v2130 = vmax.f32 %v1792, %v2081
        %v2131 = vmax.f32 %v1793, %v2083
        %v2132 = vmax.f32 %v1794, %v2085
        %v2133 = vmax.f32 %v1795, %v2087
        %v2134 = vmax.f32 %v1796, %v2089
        %v2135 = vmax.f32 %v1806, %v2072
        %v2136 = vmax.f32 %v1807, %v2074
        %v2137 = vmax.f32 %v1808, %v2076
        %v2138 = vmax.f32 %v1809, %v2078
        %v2139 = vmax.f32 %v1810, %v2080
        %v2140 = vmax.f32 %v1811, %v2082
        %v2141 = vmax.f32 %v1812, %v2084
        %v2142 = vmax.f32 %v1813, %v2086
        %v2143 = vmax.f32 %v1814, %v2088
        %vm2171 = vcmask 1040384
        %v2172 = vrot.slane %v2117, 7
        %v2173 = vrot.slane %v2118, 7
        %v2174 = vrot.slane %v2119, 7
        %v2175 = vrot.slane %v2120, 7
        %v2176 = vrot.slane %v2121, 7
        %v2177 = vrot.slane %v2122, 7
        %v2178 = vrot.slane %v2123, 7
        %v2179 = vrot.slane %v2124, 7
        %v2180 = vrot.slane %v2125, 7
        %v2181 = vrot.slane %v2126, 7
        %v2182 = vsel %vm2171, %v2172, %v2181
        %v2183 = vrot.slane %v2127, 7
        %v2184 = vsel %vm2171, %v2173, %v2183
        %v2185 = vrot.slane %v2128, 7
        %v2186 = vsel %vm2171, %v2174, %v2185
        %v2187 = vrot.slane %v2129, 7
        %v2188 = vsel %vm2171, %v2175, %v2187
        %v2189 = vrot.slane %v2130, 7
        %v2190 = vsel %vm2171, %v2176, %v2189
        %v2191 = vrot.slane %v2131, 7
        %v2192 = vsel %vm2171, %v2177, %v2191
        %v2193 = vrot.slane %v2132, 7
        %v2194 = vsel %vm2171, %v2178, %v2193
        %v2195 = vrot.slane %v2133, 7
        %v2196 = vsel %vm2171, %v2179, %v2195
        %v2197 = vrot.slane %v2134, 7
        %v2198 = vsel %vm2171, %v2180, %v2197
        %v2199 = vrot.slane %v2135, 7
        %v2200 = vsel %vm2171, %v2181, %v2199
        %v2201 = vrot.slane %v2136, 7
        %v2202 = vsel %vm2171, %v2183, %v2201
        %v2203 = vrot.slane %v2137, 7
        %v2204 = vsel %vm2171, %v2185, %v2203
        %v2205 = vrot.slane %v2138, 7
        %v2206 = vsel %vm2171, %v2187, %v2205
        %v2207 = vrot.slane %v2139, 7
        %v2208 = vsel %vm2171, %v2189, %v2207
        %v2209 = vrot.slane %v2140, 7
        %v2210 = vsel %vm2171, %v2191, %v2209
        %v2211 = vrot.slane %v2141, 7
        %v2212 = vsel %vm2171, %v2193, %v2211
        %v2213 = vrot.slane %v2142, 7
        %v2214 = vsel %vm2171, %v2195, %v2213
        %v2215 = vrot.slane %v2143, 7
        %v2216 = vsel %vm2171, %v2197, %v2215
        %v2244 = vmax.f32 %v1837, %v2172
        %v2245 = vmax.f32 %v1838, %v2173
        %v2246 = vmax.f32 %v1839, %v2174
        %v2247 = vmax.f32 %v1840, %v2175
        %v2248 = vmax.f32 %v1841, %v2176
        %v2249 = vmax.f32 %v1842, %v2177
        %v2250 = vmax.f32 %v1843, %v2178
        %v2251 = vmax.f32 %v1844, %v2179
        %v2252 = vmax.f32 %v1845, %v2180
        %v2253 = vmax.f32 %v1846, %v2182
        %v2254 = vmax.f32 %v1847, %v2184
        %v2255 = vmax.f32 %v1848, %v2186
        %v2256 = vmax.f32 %v1849, %v2188
        %v2257 = vmax.f32 %v1850, %v2190
        %v2258 = vmax.f32 %v1851, %v2192
        %v2259 = vmax.f32 %v1852, %v2194
        %v2260 = vmax.f32 %v1853, %v2196
        %v2261 = vmax.f32 %v1854, %v2198
        %v2262 = vmax.f32 %v1855, %v2200
        %v2263 = vmax.f32 %v1856, %v2202
        %v2264 = vmax.f32 %v1857, %v2204
        %v2265 = vmax.f32 %v1858, %v2206
        %v2266 = vmax.f32 %v1859, %v2208
        %v2267 = vmax.f32 %v1860, %v2210
        %v2268 = vmax.f32 %v1861, %v2212
        %v2269 = vmax.f32 %v1862, %v2214
        %v2270 = vmax.f32 %v1863, %v2216
        %v2271 = vmax.f32 %v1991, 0.0
        %v2272 = vmax.f32 %v1992, 0.0
        %v2273 = vmax.f32 %v1993, 0.0
        %v2274 = vmax.f32 %v1994, 0.0
        %v2275 = vmax.f32 %v1995, 0.0
        %v2276 = vmax.f32 %v1996, 0.0
        %v2277 = vmax.f32 %v1997, 0.0
        %v2278 = vmax.f32 %v1998, 0.0
        %v2279 = vmax.f32 %v1999, 0.0
        %v2280 = vmax.f32 %v2000, 0.0
        %v2281 = vmax.f32 %v2001, 0.0
        %v2282 = vmax.f32 %v2002, 0.0
        %v2283 = vmax.f32 %v2003, 0.0
        %v2284 = vmax.f32 %v2004, 0.0
        %v2285 = vmax.f32 %v2005, 0.0
        %v2286 = vmax.f32 %v2006, 0.0
        %v2287 = vmax.f32 %v2007, 0.0
        %v2288 = vmax.f32 %v2008, 0.0
        %v2289 = vmax.f32 %v2009, 0.0
        %v2290 = vmax.f32 %v2010, 0.0
        %v2291 = vmax.f32 %v2011, 0.0
        %v2292 = vmax.f32 %v2012, 0.0
        %v2293 = vmax.f32 %v2013, 0.0
        %v2294 = vmax.f32 %v2014, 0.0
        %v2295 = vmax.f32 %v2015, 0.0
        %v2296 = vmax.f32 %v2016, 0.0
        %v2297 = vmax.f32 %v2017, 0.0
        %v2298 = vmin.f32 %v2271, 6.4
        %v2299 = vmin.f32 %v2272, 6.4
        %v2300 = vmin.f32 %v2273, 6.4
        %v2301 = vmin.f32 %v2274, 6.4
        %v2302 = vmin.f32 %v2275, 6.4
        %v2303 = vmin.f32 %v2276, 6.4
        %v2304 = vmin.f32 %v2277, 6.4
        %v2305 = vmin.f32 %v2278, 6.4
        %v2306 = vmin.f32 %v2279, 6.4
        %v2307 = vmin.f32 %v2280, 6.4
        %v2308 = vmin.f32 %v2281, 6.4
        %v2309 = vmin.f32 %v2282, 6.4
        %v2310 = vmin.f32 %v2283, 6.4
        %v2311 = vmin.f32 %v2284, 6.4
        %v2312 = vmin.f32 %v2285, 6.4
        %v2313 = vmin.f32 %v2286, 6.4
        %v2314 = vmin.f32 %v2287, 6.4
        %v2315 = vmin.f32 %v2288, 6.4
        %v2316 = vmin.f32 %v2289, 6.4
        %v2317 = vmin.f32 %v2290, 6.4
        %v2318 = vmin.f32 %v2291, 6.4
        %v2319 = vmin.f32 %v2292, 6.4
        %v2320 = vmin.f32 %v2293, 6.4
        %v2321 = vmin.f32 %v2294, 6.4
        %v2322 = vmin.f32 %v2295, 6.4
        %v2323 = vmin.f32 %v2296, 6.4
        %v2324 = vmin.f32 %v2297, 6.4
        %2325 = vst [vmem:[%s198] sm:$0xff] %v2298
        %2326 = vst [vmem:[%s198 + $0x8] sm:$0xff] %v2299
        %2327 = vst [vmem:[%s198 + $0x10] sm:$0xff] %v2300
        %2328 = vst [vmem:[%s198 + $0x18] sm:$0xff] %v2301
        %2329 = vst [vmem:[%s198 + $0x20] sm:$0xff] %v2302
        %2330 = vst [vmem:[%s198 + $0x28] sm:$0xff] %v2303
        %2331 = vst [vmem:[%s198 + $0x30] sm:$0xff] %v2304
        %2332 = vst [vmem:[%s198 + $0x38] sm:$0xff] %v2305
        %2333 = vst [vmem:[%s198 + $0x40] sm:$0xff] %v2306
        %2334 = vst [vmem:[%s198 + $0x90] sm:$0xff] %v2307
        %2335 = vst [vmem:[%s198 + $0x98] sm:$0xff] %v2308
        %2336 = vst [vmem:[%s198 + $0xa0] sm:$0xff] %v2309
        %2337 = vst [vmem:[%s198 + $0xa8] sm:$0xff] %v2310
        %2338 = vst [vmem:[%s198 + $0xb0] sm:$0xff] %v2311
        %2339 = vst [vmem:[%s198 + $0xb8] sm:$0xff] %v2312
        %2340 = vst [vmem:[%s198 + $0xc0] sm:$0xff] %v2313
        %2341 = vst [vmem:[%s198 + $0xc8] sm:$0xff] %v2314
        %2342 = vst [vmem:[%s198 + $0xd0] sm:$0xff] %v2315
        %2343 = vst [vmem:[%s198 + $0x120] sm:$0x1] %v2316
        %2344 = vst [vmem:[%s198 + $0x128] sm:$0x1] %v2317
        %2345 = vst [vmem:[%s198 + $0x130] sm:$0x1] %v2318
        %2346 = vst [vmem:[%s198 + $0x138] sm:$0x1] %v2319
        %2347 = vst [vmem:[%s198 + $0x140] sm:$0x1] %v2320
        %2348 = vst [vmem:[%s198 + $0x148] sm:$0x1] %v2321
        %2349 = vst [vmem:[%s198 + $0x150] sm:$0x1] %v2322
        %2350 = vst [vmem:[%s198 + $0x158] sm:$0x1] %v2323
        %2351 = vst [vmem:[%s198 + $0x160] sm:$0x1] %v2324
        %v2352 = vmax.f32 %v2244, 0.0
        %v2353 = vmax.f32 %v2245, 0.0
        %v2354 = vmax.f32 %v2246, 0.0
        %v2355 = vmax.f32 %v2247, 0.0
        %v2356 = vmax.f32 %v2248, 0.0
        %v2357 = vmax.f32 %v2249, 0.0
        %v2358 = vmax.f32 %v2250, 0.0
        %v2359 = vmax.f32 %v2251, 0.0
        %v2360 = vmax.f32 %v2252, 0.0
        %v2361 = vmax.f32 %v2253, 0.0
        %v2362 = vmax.f32 %v2254, 0.0
        %v2363 = vmax.f32 %v2255, 0.0
        %v2364 = vmax.f32 %v2256, 0.0
        %v2365 = vmax.f32 %v2257, 0.0
        %v2366 = vmax.f32 %v2258, 0.0
        %v2367 = vmax.f32 %v2259, 0.0
        %v2368 = vmax.f32 %v2260, 0.0
        %v2369 = vmax.f32 %v2261, 0.0
        %v2370 = vmax.f32 %v2262, 0.0
        %v2371 = vmax.f32 %v2263, 0.0
        %v2372 = vmax.f32 %v2264, 0.0
        %v2373 = vmax.f32 %v2265, 0.0
        %v2374 = vmax.f32 %v2266, 0.0
        %v2375 = vmax.f32 %v2267, 0.0
        %v2376 = vmax.f32 %v2268, 0.0
        %v2377 = vmax.f32 %v2269, 0.0
        %v2378 = vmax.f32 %v2270, 0.0
        %v2379 = vmin.f32 %v2352, 6.4
        %v2380 = vmin.f32 %v2353, 6.4
        %v2381 = vmin.f32 %v2354, 6.4
        %v2382 = vmin.f32 %v2355, 6.4
        %v2383 = vmin.f32 %v2356, 6.4
        %v2384 = vmin.f32 %v2357, 6.4
        %v2385 = vmin.f32 %v2358, 6.4
        %v2386 = vmin.f32 %v2359, 6.4
        %v2387 = vmin.f32 %v2360, 6.4
        %v2388 = vmin.f32 %v2361, 6.4
        %v2389 = vmin.f32 %v2362, 6.4
        %v2390 = vmin.f32 %v2363, 6.4
        %v2391 = vmin.f32 %v2364, 6.4
        %v2392 = vmin.f32 %v2365, 6.4
        %v2393 = vmin.f32 %v2366, 6.4
        %v2394 = vmin.f32 %v2367, 6.4
        %v2395 = vmin.f32 %v2368, 6.4
        %v2396 = vmin.f32 %v2369, 6.4
        %v2397 = vmin.f32 %v2370, 6.4
        %v2398 = vmin.f32 %v2371, 6.4
        %v2399 = vmin.f32 %v2372, 6.4
        %v2400 = vmin.f32 %v2373, 6.4
        %v2401 = vmin.f32 %v2374, 6.4
        %v2402 = vmin.f32 %v2375, 6.4
        %v2403 = vmin.f32 %v2376, 6.4
        %v2404 = vmin.f32 %v2377, 6.4
        %v2405 = vmin.f32 %v2378, 6.4
        %v2433 = vrot.slane %v2379, 1
        %v2434 = vrot.slane %v2388, 1
        %v2435 = vsel %vm1891, %v2433, %v2434
        %v2436 = vrot.slane %v2380, 1
        %v2437 = vrot.slane %v2389, 1
        %v2438 = vsel %vm1891, %v2436, %v2437
        %v2439 = vrot.slane %v2381, 1
        %v2440 = vrot.slane %v2390, 1
        %v2441 = vsel %vm1891, %v2439, %v2440
        %v2442 = vrot.slane %v2382, 1
        %v2443 = vrot.slane %v2391, 1
        %v2444 = vsel %vm1891, %v2442, %v2443
        %v2445 = vrot.slane %v2383, 1
        %v2446 = vrot.slane %v2392, 1
        %v2447 = vsel %vm1891, %v2445, %v2446
        %v2448 = vrot.slane %v2384, 1
        %v2449 = vrot.slane %v2393, 1
        %v2450 = vsel %vm1891, %v2448, %v2449
        %v2451 = vrot.slane %v2385, 1
        %v2452 = vrot.slane %v2394, 1
        %v2453 = vsel %vm1891, %v2451, %v2452
        %v2454 = vrot.slane %v2386, 1
        %v2455 = vrot.slane %v2395, 1
        %v2456 = vsel %vm1891, %v2454, %v2455
        %v2457 = vrot.slane %v2387, 1
        %v2458 = vrot.slane %v2396, 1
        %v2459 = vsel %vm1891, %v2457, %v2458
        %v2460 = vrot.slane %v2397, 1
        %v2461 = vsel %vm1891, %v2434, %v2460
        %v2462 = vrot.slane %v2398, 1
        %v2463 = vsel %vm1891, %v2437, %v2462
        %v2464 = vrot.slane %v2399, 1
        %v2465 = vsel %vm1891, %v2440, %v2464
        %v2466 = vrot.slane %v2400, 1
        %v2467 = vsel %vm1891, %v2443, %v2466
        %v2468 = vrot.slane %v2401, 1
        %v2469 = vsel %vm1891, %v2446, %v2468
        %v2470 = vrot.slane %v2402, 1
        %v2471 = vsel %vm1891, %v2449, %v2470
        %v2472 = vrot.slane %v2403, 1
        %v2473 = vsel %vm1891, %v2452, %v2472
        %v2474 = vrot.slane %v2404, 1
        %v2475 = vsel %vm1891, %v2455, %v2474
        %v2476 = vrot.slane %v2405, 1
        %v2477 = vsel %vm1891, %v2458, %v2476
        %2505 = vst [vmem:[%s198 + $0x48] sm:$0xff] %v2435
        %2506 = vst [vmem:[%s198 + $0x50] sm:$0xff] %v2438
        %2507 = vst [vmem:[%s198 + $0x58] sm:$0xff] %v2441
        %2508 = vst [vmem:[%s198 + $0x60] sm:$0xff] %v2444
        %2509 = vst [vmem:[%s198 + $0x68] sm:$0xff] %v2447
        %2510 = vst [vmem:[%s198 + $0x70] sm:$0xff] %v2450
        %2511 = vst [vmem:[%s198 + $0x78] sm:$0xff] %v2453
        %2512 = vst [vmem:[%s198 + $0x80] sm:$0xff] %v2456
        %2513 = vst [vmem:[%s198 + $0x88] sm:$0xff] %v2459
        %2514 = vst [vmem:[%s198 + $0xd8] sm:$0xff] %v2461
        %2515 = vst [vmem:[%s198 + $0xe0] sm:$0xff] %v2463
        %2516 = vst [vmem:[%s198 + $0xe8] sm:$0xff] %v2465
        %2517 = vst [vmem:[%s198 + $0xf0] sm:$0xff] %v2467
        %2518 = vst [vmem:[%s198 + $0xf8] sm:$0xff] %v2469
        %2519 = vst [vmem:[%s198 + $0x100] sm:$0xff] %v2471
        %2520 = vst [vmem:[%s198 + $0x108] sm:$0xff] %v2473
        %2521 = vst [vmem:[%s198 + $0x110] sm:$0xff] %v2475
        %2522 = vst [vmem:[%s198 + $0x118] sm:$0xff] %v2477
        %2523 = vst [vmem:[%s198 + $0x168] sm:$0x1] %v2460
        %2524 = vst [vmem:[%s198 + $0x170] sm:$0x1] %v2462
        %2525 = vst [vmem:[%s198 + $0x178] sm:$0x1] %v2464
        %2526 = vst [vmem:[%s198 + $0x180] sm:$0x1] %v2466
        %2527 = vst [vmem:[%s198 + $0x188] sm:$0x1] %v2468
        %2528 = vst [vmem:[%s198 + $0x190] sm:$0x1] %v2470
        %2529 = vst [vmem:[%s198 + $0x198] sm:$0x1] %v2472
        %2530 = vst [vmem:[%s198 + $0x1a0] sm:$0x1] %v2474
        %2531 = vst [vmem:[%s198 + $0x1a8] sm:$0x1] %v2476
        %p2532 = scmp.lt.s32.totalorder %s16, 1
        %s2533 = scalar_select %p2532, %s16, 1
        %s2534 = smul.addr %s2533, 54
        %s2535 = smul.addr %s2534, 8
        %s2536 = scalar_lea.vmem %s3, %s2535
        // Predicated region
        $region41: #{model_forward.1} parent=31 // pred_check
          %p2537 = pneg %p102
        $region42: #{model_forward.1} parent=31 // pred_check_branch
          %2539 = sbr.rel (%p2537) target = $region44
        $region43: #{model_forward.1} parent=31 // pred_region
          _
        $region44: #{model_forward.1} parent=31 // pred_fallthru
          _
      $region32: #{model_forward.1} parent=5 // pred_fallthru
        _
      %p2540 = scmp.le.s32.totalorder 2, %s11
      // Predicated region
      $region45: #{model_forward.1} parent=5 // pred_check
        %p2541 = pneg %p2540
      $region46: #{model_forward.1} parent=5 // pred_check_branch
        %2543 = sbr.rel (%p2541) target = $region48
      $region47: #{model_forward.1} parent=5 // pred_region
        %s2544 = ssub.s32 %s11, 2
        // Predicated region
        $region49: #{model_forward.1} parent=47 // pred_check
          %p2545 = pneg %p108
        $region50: #{model_forward.1} parent=47 // pred_check_branch
          %2547 = sbr.rel (%p2545) target = $region52
        $region51: #{model_forward.1} parent=47 // pred_region
          %p2548 = scmp.lt.s32.totalorder %s17, 1
          %s2549 = scalar_select %p2548, %s17, 1
          %s2550 = smul.addr %s2549, 54
          %s2551 = smul.addr %s2550, 8
          %s2552 = scalar_lea.vmem %s3, %s2551
        $region52: #{model_forward.1} parent=47 // pred_fallthru
          _
      $region48: #{model_forward.1} parent=5 // pred_fallthru
        _
    $region6: #{model_forward.1} parent=1 // loop_footer
      %s15 = sadd.s32 1, %s11
    $region7: #{model_forward.1} parent=1 // loop_footer_branch
      %10 = sbr.rel target = $region3
    $region8: #{model_forward.1} parent=1 // loop_exit
      _
    %2553 = vsyncpa [#allocation3], 1
    %s2554 = scalar_lea.sflag [#allocation3], 1
    %2555 = vsyncpa %s2554, 1
    %2556 = vsyncpa [#allocation5], 1

</llo_original>
